<compile_context>
chip_gen: v5e
topology: v5e:2x2
jax: 0.10.0
libtpu: 0.0.40
codegen_flags: <defaults>
</compile_context>

<pallas_src>
import jax
import jax.numpy as jnp
from jax import lax
from jax.experimental import pallas as pl
from jax.experimental.pallas import tpu as pltpu


F_PAD = 128          # backbone feature channels (kept lane-dense = 128 lanes)
C_PAD = 128          # class axis padded to the 128-lane width
NEG_INF = -1.0e30    # bias for padded classes (kills them in softmax/argmax)


# ---------------------------------------------------------------------------
# Fused kernel: conv-matmul + ReLU + 1x1 head + log_softmax + NLL/acc partials
# ---------------------------------------------------------------------------
def _fused_semantic_kernel(patches_ref, labels_ref, w_bb_ref, b_bb_ref,
                           w_sem_ref, b_sem_ref, part_ref):
    # ---- backbone: im2col matmul + bias + ReLU (bf16 in, f32 accumulate) ----
    x = patches_ref[...]                                         # (tm, K) bf16
    feats = jnp.dot(x, w_bb_ref[...], preferred_element_type=jnp.float32)
    feats = jnp.maximum(feats + b_bb_ref[...], 0.0)              # (tm, F_PAD)

    # ---- semantic head: 1x1 conv + bias (padded classes get NEG_INF bias) --
    logits = jnp.dot(feats.astype(jnp.bfloat16), w_sem_ref[...],
                     preferred_element_type=jnp.float32)
    logits = logits + b_sem_ref[...]                             # (tm, C_PAD)

    # ---- log_softmax (f32) -------------------------------------------------
    m = jnp.max(logits, axis=-1, keepdims=True)                  # (tm, 1)
    shifted = logits - m
    lse = jnp.log(jnp.sum(jnp.exp(shifted), axis=-1, keepdims=True))
    logp = shifted - lse                                         # (tm, C_PAD)

    # ---- NLL (ignore_index=-1) + pixel accuracy partial sums ---------------
    lab = labels_ref[...]                                        # (tm, 1) int32
    tm, c_pad = logp.shape
    class_ids = lax.broadcasted_iota(jnp.int32, (tm, c_pad), 1)
    onehot = class_ids == lab                                    # (tm, C_PAD)
    valid = lab >= 0                                             # (tm, 1)
    validf = valid.astype(jnp.float32)

    picked = jnp.sum(jnp.where(onehot, logp, 0.0),
                     axis=-1, keepdims=True)                     # (tm, 1)

    # argmax (first maximal class) — padded classes can never win (NEG_INF)
    is_max = logits == m
    preds = jnp.min(jnp.where(is_max, class_ids, jnp.int32(c_pad)),
                    axis=-1, keepdims=True)                      # (tm, 1)
    correct = jnp.logical_and(preds == lab, valid).astype(jnp.float32)

    # Pack per-pixel contributions into lanes 0/1/2 and reduce over sublanes:
    #   lane 0 -> nll_sum, lane 1 -> valid count, lane 2 -> correct count.
    contrib = (jnp.where(class_ids == 0, -picked * validf, 0.0)
               + jnp.where(class_ids == 1, validf, 0.0)
               + jnp.where(class_ids == 2, correct, 0.0))        # (tm, C_PAD)
    partial = jnp.sum(contrib, axis=0, keepdims=True)            # (1, C_PAD)

    sub = lax.broadcasted_iota(jnp.int32, (8, c_pad), 0)
    part_ref[...] = jnp.where(sub == 0, partial, 0.0)            # (8, C_PAD)


def fused_semantic_forward(patches_bf16, labels, w_bb, b_bb, w_sem, b_sem,
                           *, tile_m=512):
    """patches_bf16: (M, K) bf16, labels: (M, 1) int32 (M % tile_m == 0)."""
    M, K = patches_bf16.shape
    num_tiles = M // tile_m

    partials = pl.pallas_call(
        _fused_semantic_kernel,
        out_shape=jax.ShapeDtypeStruct((num_tiles * 8, C_PAD), jnp.float32),
        grid=(num_tiles,),
        in_specs=[
            pl.BlockSpec((tile_m, K), lambda i: (i, 0)),     # patches tile
            pl.BlockSpec((tile_m, 1), lambda i: (i, 0)),     # labels tile
            pl.BlockSpec((K, F_PAD), lambda i: (0, 0)),      # backbone weights
            pl.BlockSpec((1, F_PAD), lambda i: (0, 0)),      # backbone bias
            pl.BlockSpec((F_PAD, C_PAD), lambda i: (0, 0)),  # head weights
            pl.BlockSpec((1, C_PAD), lambda i: (0, 0)),      # head bias (+mask)
        ],
        out_specs=pl.BlockSpec((8, C_PAD), lambda i: (i, 0)),
        compiler_params=pltpu.CompilerParams(
            dimension_semantics=("parallel",),
            vmem_limit_bytes=32 * 1024 * 1024,
        ),
    )(patches_bf16, labels, w_bb, b_bb, w_sem, b_sem)

    sums = jnp.sum(partials, axis=0)               # (C_PAD,)
    nll_sum, count, acc_sum = sums[0], sums[1], sums[2]
    # NLLLoss(reduction='mean', ignore_index=-1): NaN if every pixel ignored
    # (matches PyTorch); pixel_acc uses the +1e-10 guard (matches module).
    semantic_loss = nll_sum / count
    acc = acc_sum / (count + 1e-10)
    return semantic_loss, acc


# ---------------------------------------------------------------------------
# Glue (plain JAX): im2col for the 3x3 backbone conv, parameter setup
# ---------------------------------------------------------------------------
def im2col_3x3(x_nhwc):
    B, H, W, Cin = x_nhwc.shape
    xp = jnp.pad(x_nhwc, ((0, 0), (1, 1), (1, 1), (0, 0)))
    patches = [xp[:, kh:kh + H, kw:kw + W, :] for kh in range(3) for kw in range(3)]
    cols = jnp.stack(patches, axis=3)              # (B, H, W, 9, Cin)
    return cols.reshape(B * H * W, 9 * Cin)


def init_params(key, cin, num_classes):
    assert num_classes <= C_PAD
    k1, k2 = jax.random.split(key, 2)
    # backbone 3x3 conv weights, (kh, kw, cin, F_PAD) -> (9*cin, F_PAD), bf16
    w_bb = (jax.random.normal(k1, (3, 3, cin, F_PAD), jnp.float32) * 0.1
            ).reshape(9 * cin, F_PAD).astype(jnp.bfloat16)
    b_bb = jnp.zeros((1, F_PAD), jnp.float32)
    # semantic head 1x1 conv, class axis padded to 128 lanes.
    w_real = jax.random.normal(k2, (F_PAD, num_classes), jnp.float32) * 0.1
    w_sem = jnp.concatenate(
        [w_real, jnp.zeros((F_PAD, C_PAD - num_classes), jnp.float32)],
        axis=1).astype(jnp.bfloat16)
    b_sem = jnp.concatenate(
        [jnp.zeros((1, num_classes), jnp.float32),
         jnp.full((1, C_PAD - num_classes), NEG_INF, jnp.float32)],
        axis=1)
    return dict(w_bb=w_bb, b_bb=b_bb, w_sem=w_sem, b_sem=b_sem)


def model_forward(feed_dict, params, mode="semantic", deep_sup_scale=None,
                  tile_m=512):
    """Replicates Model.forward for mode='semantic', segSize=None, training."""
    if mode != "semantic":
        raise NotImplementedError("only mode='semantic' is implemented")

    img = feed_dict["img_data"]                    # NCHW, like PyTorch
    seg_label = feed_dict["seg_label"]             # (B, H, W) int32, -1 ignore
    B, Cin, H, W = img.shape

    x_nhwc = jnp.transpose(img, (0, 2, 3, 1)).astype(jnp.float32)
    patches = im2col_3x3(x_nhwc).astype(jnp.bfloat16)        # (M, 9*Cin) bf16
    labels = seg_label.reshape(-1, 1).astype(jnp.int32)      # (M, 1)

    M = patches.shape[0]
    M_pad = ((M + tile_m - 1) // tile_m) * tile_m
    if M_pad != M:
        patches = jnp.pad(patches, ((0, M_pad - M), (0, 0)))
        labels = jnp.pad(labels, ((0, M_pad - M), (0, 0)), constant_values=-1)

    semantic_loss, acc = fused_semantic_forward(
        patches, labels, params["w_bb"], params["b_bb"],
        params["w_sem"], params["b_sem"], tile_m=tile_m)

    total_loss = semantic_loss                     # deep_sup_scale is None
    # matches: return (total_loss, semantic_loss, None, acc, None, None, None)
    return (total_loss, semantic_loss, None, acc, None, None, None)


if __name__ == "__main__":
    B, Cin, H, W = 2, 3, 16, 16
    num_classes = 8

    key = jax.random.PRNGKey(0)
    k_img, k_lab, k_par = jax.random.split(key, 3)

    img_data = jax.random.normal(k_img, (B, Cin, H, W), jnp.float32)
    # labels in [-1, num_classes): -1 pixels are ignored by the critic
    seg_label = jax.random.randint(k_lab, (B, H, W), -1, num_classes, jnp.int32)

    params = init_params(k_par, Cin, num_classes)
    feed_dict = {"img_data": img_data, "seg_label": seg_label}

    # tile_m=128 so the small demo image (M=512 pixels) exercises a 4-step grid.
    out = model_forward(feed_dict, params, mode="semantic", tile_m=128)
    total_loss, semantic_loss, _, acc, _, _, _ = out
    jax.block_until_ready((total_loss, semantic_loss, acc))
    print("KERNEL_OK")
</pallas_src>

<mosaic_0001>
module attributes {stable_mosaic.version = 11 : i64} {
  func.func @_fused_semantic_kernel(%arg0: i32, %arg1: memref<128x27xbf16, #tpu.memory_space<vmem>>, %arg2: memref<128x1xi32, #tpu.memory_space<vmem>>, %arg3: memref<27x128xbf16, #tpu.memory_space<vmem>>, %arg4: memref<1x128xf32, #tpu.memory_space<vmem>>, %arg5: memref<128x128xbf16, #tpu.memory_space<vmem>>, %arg6: memref<1x128xf32, #tpu.memory_space<vmem>>, %arg7: memref<8x128xf32, #tpu.memory_space<vmem>>) attributes {dimension_semantics = [#tpu.dimension_semantics<parallel>], iteration_bounds = array<i64: 4>, scalar_prefetch = 0 : i64, scratch_operands = 0 : i64, tpu.core_type = #tpu.core_type<tc>, window_params = [{transform_indices = @transform_0, window_bounds = array<i64: 128, 27>}, {transform_indices = @transform_1, window_bounds = array<i64: 128, 1>}, {pipeline_mode = #tpu.pipeline_mode<synchronous>, transform_indices = @transform_2, window_bounds = array<i64: 27, 128>}, {pipeline_mode = #tpu.pipeline_mode<synchronous>, transform_indices = @transform_3, window_bounds = array<i64: 1, 128>}, {pipeline_mode = #tpu.pipeline_mode<synchronous>, transform_indices = @transform_4, window_bounds = array<i64: 128, 128>}, {pipeline_mode = #tpu.pipeline_mode<synchronous>, transform_indices = @transform_5, window_bounds = array<i64: 1, 128>}, {transform_indices = @transform_6, window_bounds = array<i64: 8, 128>}]} {
    %c0 = arith.constant 0 : index
    %c0_0 = arith.constant 0 : index
    %0 = vector.load %arg1[%c0, %c0_0] : memref<128x27xbf16, #tpu.memory_space<vmem>>, vector<128x27xbf16>
    %c0_1 = arith.constant 0 : index
    %c0_2 = arith.constant 0 : index
    %1 = vector.load %arg3[%c0_1, %c0_2] : memref<27x128xbf16, #tpu.memory_space<vmem>>, vector<27x128xbf16>
    %cst = arith.constant dense<0.000000e+00> : vector<128x128xf32>
    %2 = tpu.matmul %0, %1, %cst {dimension_numbers = #tpu.dot_dimension_numbers<[1], [0], [0], [1], [0, 0, 1, 1], [], []>} : vector<128x27xbf16>, vector<27x128xbf16>, vector<128x128xf32> -> vector<128x128xf32>
    %c0_3 = arith.constant 0 : index
    %c0_4 = arith.constant 0 : index
    %3 = vector.load %arg4[%c0_3, %c0_4] : memref<1x128xf32, #tpu.memory_space<vmem>>, vector<1x128xf32>
    %4 = vector.broadcast %3 : vector<1x128xf32> to vector<128x128xf32>
    %5 = arith.addf %2, %4 : vector<128x128xf32>
    %cst_5 = arith.constant 0.000000e+00 : f32
    %6 = vector.broadcast %cst_5 : f32 to vector<128x128xf32>
    %7 = arith.maximumf %5, %6 : vector<128x128xf32>
    %8 = arith.truncf %7 : vector<128x128xf32> to vector<128x128xbf16>
    %c0_6 = arith.constant 0 : index
    %c0_7 = arith.constant 0 : index
    %9 = vector.load %arg5[%c0_6, %c0_7] : memref<128x128xbf16, #tpu.memory_space<vmem>>, vector<128x128xbf16>
    %cst_8 = arith.constant dense<0.000000e+00> : vector<128x128xf32>
    %10 = tpu.matmul %8, %9, %cst_8 {dimension_numbers = #tpu.dot_dimension_numbers<[1], [0], [0], [1], [0, 0, 1, 1], [], []>} : vector<128x128xbf16>, vector<128x128xbf16>, vector<128x128xf32> -> vector<128x128xf32>
    %c0_9 = arith.constant 0 : index
    %c0_10 = arith.constant 0 : index
    %11 = vector.load %arg6[%c0_9, %c0_10] : memref<1x128xf32, #tpu.memory_space<vmem>>, vector<1x128xf32>
    %12 = vector.broadcast %11 : vector<1x128xf32> to vector<128x128xf32>
    %13 = arith.addf %10, %12 : vector<128x128xf32>
    %cst_11 = arith.constant dense<0xFF800000> : vector<128xf32>
    %14 = vector.multi_reduction <maximumf>, %13, %cst_11 [1] : vector<128x128xf32> to vector<128xf32>
    %15 = vector.shape_cast %14 : vector<128xf32> to vector<128x1xf32>
    %16 = vector.broadcast %15 : vector<128x1xf32> to vector<128x128xf32>
    %17 = arith.subf %13, %16 : vector<128x128xf32>
    %18 = math.exp %17 : vector<128x128xf32>
    %cst_12 = arith.constant dense<0.000000e+00> : vector<128xf32>
    %19 = vector.multi_reduction <add>, %18, %cst_12 [1] : vector<128x128xf32> to vector<128xf32>
    %20 = vector.shape_cast %19 : vector<128xf32> to vector<128x1xf32>
    %21 = math.log %20 : vector<128x1xf32>
    %22 = vector.broadcast %21 : vector<128x1xf32> to vector<128x128xf32>
    %23 = arith.subf %17, %22 : vector<128x128xf32>
    %c0_13 = arith.constant 0 : index
    %c0_14 = arith.constant 0 : index
    %24 = vector.load %arg2[%c0_13, %c0_14] : memref<128x1xi32, #tpu.memory_space<vmem>>, vector<128x1xi32>
    %25 = tpu.iota {dimensions = array<i32: 1>} : vector<128x128xi32>
    %26 = vector.broadcast %24 : vector<128x1xi32> to vector<128x128xi32>
    %27 = arith.cmpi eq, %25, %26 : vector<128x128xi32>
    %c0_i32 = arith.constant 0 : i32
    %28 = vector.broadcast %c0_i32 : i32 to vector<128x1xi32>
    %29 = arith.cmpi sge, %24, %28 : vector<128x1xi32>
    %30 = arith.extui %29 : vector<128x1xi1> to vector<128x1xi32>
    %31 = arith.sitofp %30 : vector<128x1xi32> to vector<128x1xf32>
    %cst_15 = arith.constant 0.000000e+00 : f32
    %32 = vector.broadcast %cst_15 : f32 to vector<128x128xf32>
    %33 = arith.select %27, %23, %32 : vector<128x128xi1>, vector<128x128xf32>
    %cst_16 = arith.constant dense<0.000000e+00> : vector<128xf32>
    %34 = vector.multi_reduction <add>, %33, %cst_16 [1] : vector<128x128xf32> to vector<128xf32>
    %35 = vector.shape_cast %34 : vector<128xf32> to vector<128x1xf32>
    %36 = vector.broadcast %15 : vector<128x1xf32> to vector<128x128xf32>
    %37 = arith.cmpf oeq, %13, %36 : vector<128x128xf32>
    %c128_i32 = arith.constant 128 : i32
    %38 = vector.broadcast %c128_i32 : i32 to vector<128x128xi32>
    %39 = arith.select %37, %25, %38 : vector<128x128xi1>, vector<128x128xi32>
    %cst_17 = arith.constant dense<2147483647> : vector<128xi32>
    %40 = vector.multi_reduction <minsi>, %39, %cst_17 [1] : vector<128x128xi32> to vector<128xi32>
    %41 = vector.shape_cast %40 : vector<128xi32> to vector<128x1xi32>
    %42 = arith.cmpi eq, %41, %24 : vector<128x1xi32>
    %43 = arith.andi %42, %29 : vector<128x1xi1>
    %44 = arith.extui %43 : vector<128x1xi1> to vector<128x1xi32>
    %45 = arith.sitofp %44 : vector<128x1xi32> to vector<128x1xf32>
    %c0_i32_18 = arith.constant 0 : i32
    %46 = vector.broadcast %c0_i32_18 : i32 to vector<128x128xi32>
    %47 = arith.cmpi eq, %25, %46 : vector<128x128xi32>
    %cst_19 = arith.constant 0.000000e+00 : f32
    %48 = vector.broadcast %cst_19 : f32 to vector<128x1xf32>
    %49 = arith.subf %48, %35 : vector<128x1xf32>
    %50 = arith.mulf %49, %31 : vector<128x1xf32>
    %cst_20 = arith.constant 0.000000e+00 : f32
    %51 = vector.shape_cast %50 : vector<128x1xf32> to vector<128x1xf32>
    %52 = vector.broadcast %51 : vector<128x1xf32> to vector<128x128xf32>
    %53 = vector.broadcast %cst_20 : f32 to vector<128x128xf32>
    %54 = arith.select %47, %52, %53 : vector<128x128xi1>, vector<128x128xf32>
    %c1_i32 = arith.constant 1 : i32
    %55 = vector.broadcast %c1_i32 : i32 to vector<128x128xi32>
    %56 = arith.cmpi eq, %25, %55 : vector<128x128xi32>
    %cst_21 = arith.constant 0.000000e+00 : f32
    %57 = vector.shape_cast %31 : vector<128x1xf32> to vector<128x1xf32>
    %58 = vector.broadcast %57 : vector<128x1xf32> to vector<128x128xf32>
    %59 = vector.broadcast %cst_21 : f32 to vector<128x128xf32>
    %60 = arith.select %56, %58, %59 : vector<128x128xi1>, vector<128x128xf32>
    %61 = arith.addf %54, %60 : vector<128x128xf32>
    %c2_i32 = arith.constant 2 : i32
    %62 = vector.broadcast %c2_i32 : i32 to vector<128x128xi32>
    %63 = arith.cmpi eq, %25, %62 : vector<128x128xi32>
    %cst_22 = arith.constant 0.000000e+00 : f32
    %64 = vector.shape_cast %45 : vector<128x1xf32> to vector<128x1xf32>
    %65 = vector.broadcast %64 : vector<128x1xf32> to vector<128x128xf32>
    %66 = vector.broadcast %cst_22 : f32 to vector<128x128xf32>
    %67 = arith.select %63, %65, %66 : vector<128x128xi1>, vector<128x128xf32>
    %68 = arith.addf %61, %67 : vector<128x128xf32>
    %cst_23 = arith.constant dense<0.000000e+00> : vector<128xf32>
    %69 = vector.multi_reduction <add>, %68, %cst_23 [0] : vector<128x128xf32> to vector<128xf32>
    %70 = vector.shape_cast %69 : vector<128xf32> to vector<1x128xf32>
    %71 = tpu.iota {dimensions = array<i32: 0>} : vector<8x128xi32>
    %c0_i32_24 = arith.constant 0 : i32
    %72 = vector.broadcast %c0_i32_24 : i32 to vector<8x128xi32>
    %73 = arith.cmpi eq, %71, %72 : vector<8x128xi32>
    %cst_25 = arith.constant 0.000000e+00 : f32
    %74 = vector.shape_cast %70 : vector<1x128xf32> to vector<1x128xf32>
    %75 = vector.broadcast %74 : vector<1x128xf32> to vector<8x128xf32>
    %76 = vector.broadcast %cst_25 : f32 to vector<8x128xf32>
    %77 = arith.select %73, %75, %76 : vector<8x128xi1>, vector<8x128xf32>
    %c0_26 = arith.constant 0 : index
    %c0_27 = arith.constant 0 : index
    %78 = vector.load %arg7[%c0_26, %c0_27] : memref<8x128xf32, #tpu.memory_space<vmem>>, vector<8x128xf32>
    tpu.vector_store %arg7[%c0_26, %c0_27], %77 {strides = array<i32>} : memref<8x128xf32, #tpu.memory_space<vmem>>, vector<8x128xf32>,
    return
  }
  func.func @transform_0(%arg0: i32) -> (i32, i32) {
    %c0_i32 = arith.constant 0 : i32
    %c0_i32_0 = arith.constant 0 : i32
    return %arg0, %c0_i32 : i32, i32
  }
  func.func @transform_1(%arg0: i32) -> (i32, i32) {
    %c0_i32 = arith.constant 0 : i32
    %c0_i32_0 = arith.constant 0 : i32
    return %arg0, %c0_i32 : i32, i32
  }
  func.func @transform_2(%arg0: i32) -> (i32, i32) {
    %c0_i32 = arith.constant 0 : i32
    %c0_i32_0 = arith.constant 0 : i32
    %c0_i32_1 = arith.constant 0 : i32
    return %c0_i32, %c0_i32_0 : i32, i32
  }
  func.func @transform_3(%arg0: i32) -> (i32, i32) {
    %c0_i32 = arith.constant 0 : i32
    %c0_i32_0 = arith.constant 0 : i32
    %c0_i32_1 = arith.constant 0 : i32
    return %c0_i32, %c0_i32_0 : i32, i32
  }
  func.func @transform_4(%arg0: i32) -> (i32, i32) {
    %c0_i32 = arith.constant 0 : i32
    %c0_i32_0 = arith.constant 0 : i32
    %c0_i32_1 = arith.constant 0 : i32
    return %c0_i32, %c0_i32_0 : i32, i32
  }
  func.func @transform_5(%arg0: i32) -> (i32, i32) {
    %c0_i32 = arith.constant 0 : i32
    %c0_i32_0 = arith.constant 0 : i32
    %c0_i32_1 = arith.constant 0 : i32
    return %c0_i32, %c0_i32_0 : i32, i32
  }
  func.func @transform_6(%arg0: i32) -> (i32, i32) {
    %c0_i32 = arith.constant 0 : i32
    %c0_i32_0 = arith.constant 0 : i32
    return %arg0, %c0_i32 : i32, i32
  }
}

</mosaic_0001>

<llo_original>
// kernel: tpu_custom_call.1
$region0: #{tpu_custom_call.1}
  #allocation0 [shape = 'u32[]', space=smem, size = 0x4, offset = 0x4, fixed_abs, tag = 'smem constant byte address 0x4 - core index']
  #allocation1 [shape = 'u32[72,128]{1,0:T(1,128)}', space=vmem, size = 0x9000, scoped, tag = 'internal scratch']
  %s0 = inlined_call_operand.vmem [shape: bf16[512,27], index: 0, kind: input, shape index: {}]
  %s1 = inlined_call_operand.vmem [shape: s32[512,1], index: 1, kind: input, shape index: {}]
  %s2 = inlined_call_operand.vmem [shape: bf16[27,128], index: 2, kind: input, shape index: {}]
  %s3 = inlined_call_operand.vmem [shape: f32[1,128], index: 3, kind: input, shape index: {}]
  %s4 = inlined_call_operand.vmem [shape: bf16[128,128], index: 4, kind: input, shape index: {}]
  %s5 = inlined_call_operand.vmem [shape: f32[1,128], index: 5, kind: input, shape index: {}]
  %s6 = inlined_call_operand.hbm [shape: f32[32,128], index: 6, kind: output, shape index: {}]
  %s7 = sld [smem:[#allocation0]]
  $region57: #{tpu_custom_call.1} parent=0
    _
  %s9 = ssub.s32 1, %s7
  %s10 = scalar_select 0, %s9, %s7
  $region1: #{tpu_custom_call.1} parent=0
    #allocation2 [shape = 'u8[8192]{0}', space=vmem, size = 0x2000, scoped, tag = 'output window, operand 0']
    #allocation3 [shape = 's32[2]{0}', space=sflag, size = 0x8, scoped, tag = 'scoped memory for tpu_custom_call.1']
    %11 = vsyncpa [#allocation3], 0
    %s12 = scalar_lea.sflag [#allocation3], 1
    %13 = vsyncpa %s12, 0
    loop: start=0, step=1, limit=6
    $region2: #{tpu_custom_call.1} parent=1 // loop_pre_header
      _
    $region3: #{tpu_custom_call.1} parent=1 // loop_header
      %s15 = sphi 0, %s19
      %p16 = scmp.ge.s32.totalorder %s15, 6
      %s25 = sphi 0, %s27
      %s28 = sphi 0, %s25
      %s29 = sphi 0, %s28
      %s45 = sphi 0, %s29
      %s51 = sphi 0, %s53
      %s54 = sphi 0, %s51
      %s55 = sphi 0, %s54
      %s71 = sphi 0, %s55
      %s75 = sphi 0, %s75
      %s77 = sphi 0, %s75
      %s78 = sphi 0, %s77
      %s92 = sphi 0, %s78
      %s96 = sphi 0, %s96
      %s98 = sphi 0, %s96
      %s99 = sphi 0, %s98
      %s113 = sphi 0, %s99
      %s117 = sphi 0, %s117
      %s119 = sphi 0, %s117
      %s120 = sphi 0, %s119
      %s134 = sphi 0, %s120
      %s138 = sphi 0, %s138
      %s140 = sphi 0, %s138
      %s141 = sphi 0, %s140
      %s155 = sphi 0, %s141
      %s161 = sphi 0, %s163
      %s164 = sphi 0, %s161
      %s165 = sphi 0, %s164
      %s181 = sphi 0, %s165
    $region4: #{tpu_custom_call.1} parent=1 // loop_header_branch
      %18 = sbr.rel (%p16) target = $region8
    $region5: #{tpu_custom_call.1} parent=1 // loop_body
      %s20 = ssub.s32 %s15, 1
      %s21 = ssub.s32 %s15, 2
      %s22 = sadd.s32 %s15, 1
      %s23 = ssub.s32 %s15, %s22
      %p24 = scmp.eq.s32.totalorder %s23, 0
      %s26 = sadd.s32 %s25, 1
      %s27 = scalar_select %p24, %s25, %s26
      %p30 = pneg %p24
      %p31 = scmp.eq.s32.totalorder %s15, 3
      %p32 = por %p30, %p31
      %p33 = scmp.ne.s32.totalorder %s25, %s28
      %p34 = scmp.eq.s32.totalorder %s15, 0
      %p35 = por %p33, %p34
      %p36 = scmp.ne.s32.totalorder %s25, %s28
      %p37 = scmp.eq.s32.totalorder %s20, 3
      %p38 = por %p36, %p37
      %p39 = scmp.ne.s32.totalorder %s28, %s29
      %p40 = scmp.eq.s32.totalorder %s20, 0
      %p41 = por %p39, %p40
      %p42 = scmp.ne.s32.totalorder %s28, %s29
      %p43 = scmp.eq.s32.totalorder %s21, 3
      %p44 = por %p42, %p43
      %p46 = scmp.ne.s32.totalorder %s29, %s45
      %p47 = scmp.eq.s32.totalorder %s21, 0
      %p48 = por %p46, %p47
      %s49 = ssub.s32 %s15, %s22
      %p50 = scmp.eq.s32.totalorder %s49, 0
      %s52 = sadd.s32 %s51, 1
      %s53 = scalar_select %p50, %s51, %s52
      %p56 = pneg %p50
      %p57 = scmp.eq.s32.totalorder %s15, 3
      %p58 = por %p56, %p57
      %p59 = scmp.ne.s32.totalorder %s51, %s54
      %p60 = scmp.eq.s32.totalorder %s15, 0
      %p61 = por %p59, %p60
      %p62 = scmp.ne.s32.totalorder %s51, %s54
      %p63 = scmp.eq.s32.totalorder %s20, 3
      %p64 = por %p62, %p63
      %p65 = scmp.ne.s32.totalorder %s54, %s55
      %p66 = scmp.eq.s32.totalorder %s20, 0
      %p67 = por %p65, %p66
      %p68 = scmp.ne.s32.totalorder %s54, %s55
      %p69 = scmp.eq.s32.totalorder %s21, 3
      %p70 = por %p68, %p69
      %p72 = scmp.ne.s32.totalorder %s55, %s71
      %p73 = scmp.eq.s32.totalorder %s21, 0
      %p74 = por %p72, %p73
      %s76 = sadd.s32 %s75, 1
      %p79 = scmp.eq.s32.totalorder %s15, 3
      %p80 = scmp.ne.s32.totalorder %s75, %s77
      %p81 = scmp.eq.s32.totalorder %s15, 0
      %p82 = por %p80, %p81
      %p83 = scmp.ne.s32.totalorder %s75, %s77
      %p84 = scmp.eq.s32.totalorder %s20, 3
      %p85 = por %p83, %p84
      %p86 = scmp.ne.s32.totalorder %s77, %s78
      %p87 = scmp.eq.s32.totalorder %s20, 0
      %p88 = por %p86, %p87
      %p89 = scmp.ne.s32.totalorder %s77, %s78
      %p90 = scmp.eq.s32.totalorder %s21, 3
      %p91 = por %p89, %p90
      %p93 = scmp.ne.s32.totalorder %s78, %s92
      %p94 = scmp.eq.s32.totalorder %s21, 0
      %p95 = por %p93, %p94
      %s97 = sadd.s32 %s96, 1
      %p100 = scmp.eq.s32.totalorder %s15, 3
      %p101 = scmp.ne.s32.totalorder %s96, %s98
      %p102 = scmp.eq.s32.totalorder %s15, 0
      %p103 = por %p101, %p102
      %p104 = scmp.ne.s32.totalorder %s96, %s98
      %p105 = scmp.eq.s32.totalorder %s20, 3
      %p106 = por %p104, %p105
      %p107 = scmp.ne.s32.totalorder %s98, %s99
      %p108 = scmp.eq.s32.totalorder %s20, 0
      %p109 = por %p107, %p108
      %p110 = scmp.ne.s32.totalorder %s98, %s99
      %p111 = scmp.eq.s32.totalorder %s21, 3
      %p112 = por %p110, %p111
      %p114 = scmp.ne.s32.totalorder %s99, %s113
      %p115 = scmp.eq.s32.totalorder %s21, 0
      %p116 = por %p114, %p115
      %s118 = sadd.s32 %s117, 1
      %p121 = scmp.eq.s32.totalorder %s15, 3
      %p122 = scmp.ne.s32.totalorder %s117, %s119
      %p123 = scmp.eq.s32.totalorder %s15, 0
      %p124 = por %p122, %p123
      %p125 = scmp.ne.s32.totalorder %s117, %s119
      %p126 = scmp.eq.s32.totalorder %s20, 3
      %p127 = por %p125, %p126
      %p128 = scmp.ne.s32.totalorder %s119, %s120
      %p129 = scmp.eq.s32.totalorder %s20, 0
      %p130 = por %p128, %p129
      %p131 = scmp.ne.s32.totalorder %s119, %s120
      %p132 = scmp.eq.s32.totalorder %s21, 3
      %p133 = por %p131, %p132
      %p135 = scmp.ne.s32.totalorder %s120, %s134
      %p136 = scmp.eq.s32.totalorder %s21, 0
      %p137 = por %p135, %p136
      %s139 = sadd.s32 %s138, 1
      %p142 = scmp.eq.s32.totalorder %s15, 3
      %p143 = scmp.ne.s32.totalorder %s138, %s140
      %p144 = scmp.eq.s32.totalorder %s15, 0
      %p145 = por %p143, %p144
      %p146 = scmp.ne.s32.totalorder %s138, %s140
      %p147 = scmp.eq.s32.totalorder %s20, 3
      %p148 = por %p146, %p147
      %p149 = scmp.ne.s32.totalorder %s140, %s141
      %p150 = scmp.eq.s32.totalorder %s20, 0
      %p151 = por %p149, %p150
      %p152 = scmp.ne.s32.totalorder %s140, %s141
      %p153 = scmp.eq.s32.totalorder %s21, 3
      %p154 = por %p152, %p153
      %p156 = scmp.ne.s32.totalorder %s141, %s155
      %p157 = scmp.eq.s32.totalorder %s21, 0
      %p158 = por %p156, %p157
      %s159 = ssub.s32 %s15, %s22
      %p160 = scmp.eq.s32.totalorder %s159, 0
      %s162 = sadd.s32 %s161, 1
      %s163 = scalar_select %p160, %s161, %s162
      %p166 = pneg %p160
      %p167 = scmp.eq.s32.totalorder %s15, 3
      %p168 = por %p166, %p167
      %p169 = scmp.ne.s32.totalorder %s161, %s164
      %p170 = scmp.eq.s32.totalorder %s15, 0
      %p171 = por %p169, %p170
      %p172 = scmp.ne.s32.totalorder %s161, %s164
      %p173 = scmp.eq.s32.totalorder %s20, 3
      %p174 = por %p172, %p173
      %p175 = scmp.ne.s32.totalorder %s164, %s165
      %p176 = scmp.eq.s32.totalorder %s20, 0
      %p177 = por %p175, %p176
      %p178 = scmp.ne.s32.totalorder %s164, %s165
      %p179 = scmp.eq.s32.totalorder %s21, 3
      %p180 = por %p178, %p179
      %p182 = scmp.ne.s32.totalorder %s165, %s181
      %p183 = scmp.eq.s32.totalorder %s21, 0
      %p184 = por %p182, %p183
      %p185 = scmp.le.s32.totalorder 1, %s15
      %p186 = scmp.lt.s32.totalorder %s15, 5
      %p187 = pnand %p185, %p186
      %p188 = pneg %p187
      // Predicated region
      $region9: #{tpu_custom_call.1} parent=5 // pred_check
        _
      $region10: #{tpu_custom_call.1} parent=5 // pred_check_branch
        %190 = sbr.rel (%p187) target = $region12
      $region11: #{tpu_custom_call.1} parent=5 // pred_region
        %s191 = ssub.s32 %s15, 1
        // Predicated region
        $region13: #{tpu_custom_call.1} parent=11 // pred_check
          %p192 = pneg %p88
        $region14: #{tpu_custom_call.1} parent=11 // pred_check_branch
          %194 = sbr.rel (%p192) target = $region16
        $region15: #{tpu_custom_call.1} parent=11 // pred_region
          _
        $region16: #{tpu_custom_call.1} parent=11 // pred_fallthru
          _
        // Predicated region
        $region17: #{tpu_custom_call.1} parent=11 // pred_check
          %p195 = pneg %p109
        $region18: #{tpu_custom_call.1} parent=11 // pred_check_branch
          %197 = sbr.rel (%p195) target = $region20
        $region19: #{tpu_custom_call.1} parent=11 // pred_region
          _
        $region20: #{tpu_custom_call.1} parent=11 // pred_fallthru
          _
        // Predicated region
        $region21: #{tpu_custom_call.1} parent=11 // pred_check
          %p198 = pneg %p130
        $region22: #{tpu_custom_call.1} parent=11 // pred_check_branch
          %200 = sbr.rel (%p198) target = $region24
        $region23: #{tpu_custom_call.1} parent=11 // pred_region
          _
        $region24: #{tpu_custom_call.1} parent=11 // pred_fallthru
          _
        // Predicated region
        $region25: #{tpu_custom_call.1} parent=11 // pred_check
          %p201 = pneg %p151
        $region26: #{tpu_custom_call.1} parent=11 // pred_check_branch
          %203 = sbr.rel (%p201) target = $region28
        $region27: #{tpu_custom_call.1} parent=11 // pred_region
          _
        $region28: #{tpu_custom_call.1} parent=11 // pred_fallthru
          _
      $region12: #{tpu_custom_call.1} parent=5 // pred_fallthru
        _
      %p204 = scmp.lt.s32.totalorder %s15, 4
      // Predicated region
      $region29: #{tpu_custom_call.1} parent=5 // pred_check
        %p205 = pneg %p204
      $region30: #{tpu_custom_call.1} parent=5 // pred_check_branch
        %207 = sbr.rel (%p205) target = $region32
      $region31: #{tpu_custom_call.1} parent=5 // pred_region
        // Predicated region
        $region33: #{tpu_custom_call.1} parent=31 // pred_check
          %p208 = pneg %p35
        $region34: #{tpu_custom_call.1} parent=31 // pred_check_branch
          %210 = sbr.rel (%p208) target = $region36
        $region35: #{tpu_custom_call.1} parent=31 // pred_region
          %s211 = smul.u32 16, %s15
          %p212 = scmp.lt.s32.totalorder %s211, 63
          %s213 = scalar_select %p212, %s211, 63
          %s214 = smul.addr %s213, 4
          %s215 = scalar_lea.vmem %s0, %s214
          %s216 = smul.u32 16, %s15
        $region36: #{tpu_custom_call.1} parent=31 // pred_fallthru
          _
        // Predicated region
        $region37: #{tpu_custom_call.1} parent=31 // pred_check
          %p217 = pneg %p61
        $region38: #{tpu_custom_call.1} parent=31 // pred_check_branch
          %219 = sbr.rel (%p217) target = $region40
        $region39: #{tpu_custom_call.1} parent=31 // pred_region
          %s220 = smul.u32 16, %s15
          %p221 = scmp.lt.s32.totalorder %s220, 63
          %s222 = scalar_select %p221, %s220, 63
          %s223 = smul.addr %s222, 8
          %s224 = scalar_lea.vmem %s1, %s223
          %s225 = smul.u32 16, %s15
        $region40: #{tpu_custom_call.1} parent=31 // pred_fallthru
          _
      $region32: #{tpu_custom_call.1} parent=5 // pred_fallthru
        _
      %p226 = scmp.le.s32.totalorder 1, %s15
      %p227 = scmp.lt.s32.totalorder %s15, 5
      %p228 = pnand %p226, %p227
      %p229 = pneg %p228
      // Predicated region
      $region41: #{tpu_custom_call.1} parent=5 // pred_check
        _
      $region42: #{tpu_custom_call.1} parent=5 // pred_check_branch
        %231 = sbr.rel (%p228) target = $region44
      $region43: #{tpu_custom_call.1} parent=5 // pred_region
        %s232 = ssub.s32 %s15, 1
        %s233 = smul.u32 16, %s20
        %p234 = scmp.lt.s32.totalorder %s233, 63
        %s235 = scalar_select %p234, %s233, 63
        %s236 = smul.addr %s235, 4
        %s237 = scalar_lea.vmem %s0, %s236
        %p238 = pneg %p41
        %p239 = pneg %p38
        %s240 = smul.u32 16, %s20
        %p241 = scmp.lt.s32.totalorder %s240, 63
        %s242 = scalar_select %p241, %s240, 63
        %s243 = smul.addr %s242, 8
        %s244 = scalar_lea.vmem %s1, %s243
        %p245 = pneg %p67
        %p246 = pneg %p64
        %p247 = pneg %p88
        %p248 = pneg %p85
        %p249 = pneg %p109
        %p250 = pneg %p106
        %p251 = pneg %p130
        %p252 = pneg %p127
        %p253 = pneg %p151
        %p254 = pneg %p148
        %p255 = pneg %p177
        %p256 = pneg %p174
        %s257 = sand.u32 %s164, 1
        %s258 = scalar_lea.sflag [#allocation3], %s257
        %s259 = sand.u32 %s164, 1
        %s260 = smul.addr %s259, 8
        %s261 = scalar_lea.vmem [#allocation2], %s260
        %s262 = smul.u32 16, %s20
        %p263 = scmp.lt.s32.totalorder %s262, 63
        %s264 = scalar_select %p263, %s262, 63
        %s265 = smul.addr %s264, 4
        %s266 = scalar_lea.vmem %s0, %s265
        %s267 = smul.u32 16, %s20
        %s268 = smul.u32 16, %s20
        %p269 = scmp.lt.s32.totalorder %s268, 63
        %s270 = scalar_select %p269, %s268, 63
        %s271 = smul.addr %s270, 8
        %s272 = scalar_lea.vmem %s1, %s271
        %s273 = smul.u32 16, %s20
        %v275 = vld [vmem:[%s266] sm:$0xf]
        %v276 = vld [vmem:[%s266 + $0x4] sm:$0xf]
        %v277 = vld [vmem:[%s266 + $0x8] sm:$0xf]
        %v278 = vld [vmem:[%s266 + $0xc] sm:$0xf]
        %v279 = vld [vmem:[%s266 + $0x10] sm:$0xf]
        %v280 = vld [vmem:[%s266 + $0x14] sm:$0xf]
        %v281 = vld [vmem:[%s266 + $0x18] sm:$0xf]
        %v282 = vld [vmem:[%s266 + $0x1c] sm:$0xf]
        %v283 = vld [vmem:[%s266 + $0x20] sm:$0xf]
        %v284 = vld [vmem:[%s266 + $0x24] sm:$0xf]
        %v285 = vld [vmem:[%s266 + $0x28] sm:$0xf]
        %v286 = vld [vmem:[%s266 + $0x2c] sm:$0xf]
        %v287 = vld [vmem:[%s266 + $0x30] sm:$0xf]
        %v288 = vld [vmem:[%s266 + $0x34] sm:$0xf]
        %v289 = vld [vmem:[%s266 + $0x38] sm:$0xf]
        %v290 = vld [vmem:[%s266 + $0x3c] sm:$0xf]
        %v291 = vld [vmem:[%s2] sm:$0xf]
        %v292 = vld [vmem:[%s2 + $0x4] sm:$0xf]
        %v293 = vld [vmem:[%s2 + $0x8] sm:$0xf]
        %v294 = vld [vmem:[%s2 + $0xc] sm:$0x3]
        %v295 = vld [vmem:[%s3] sm:$0x1]
        %v297 = vperm.slane %v295, 0
        %v315 = vunpack.c.l.b16 %v275
        %v316 = vunpack.c.l.b16 %v276
        %v317 = vunpack.c.l.b16 %v277
        %v318 = vunpack.c.l.b16 %v278
        %v319 = vunpack.c.l.b16 %v279
        %v320 = vunpack.c.l.b16 %v280
        %v321 = vunpack.c.l.b16 %v281
        %v322 = vunpack.c.l.b16 %v282
        %v323 = vunpack.c.l.b16 %v283
        %v324 = vunpack.c.l.b16 %v284
        %v325 = vunpack.c.l.b16 %v285
        %v326 = vunpack.c.l.b16 %v286
        %v327 = vunpack.c.l.b16 %v287
        %v328 = vunpack.c.l.b16 %v288
        %v329 = vunpack.c.l.b16 %v289
        %v330 = vunpack.c.l.b16 %v290
        %v331 = vpack.c.b16 %v316, %v315
        %v332 = vpack.c.b16 %v318, %v317
        %v333 = vpack.c.b16 %v320, %v319
        %v334 = vpack.c.b16 %v322, %v321
        %v335 = vpack.c.b16 %v324, %v323
        %v336 = vpack.c.b16 %v326, %v325
        %v337 = vpack.c.b16 %v328, %v327
        %v338 = vpack.c.b16 %v330, %v329
        %v343 = vunpack.c.l.b16 %v291
        %v344 = vunpack.c.l.b16 %v292
        %v345 = vunpack.c.l.b16 %v293
        %v346 = vunpack.c.l.b16 %v294
        %v347 = vpack.c.b16 %v344, %v343
        %v348 = vpack.c.b16 %v346, %v345
        %vm350 = vcmask 220160
        %v352 = vsel %vm350, %v331, 0
        %v355 = vsel %vm350, %v332, 0
        %v358 = vsel %vm350, %v333, 0
        %v361 = vsel %vm350, %v334, 0
        %v364 = vsel %vm350, %v335, 0
        %v367 = vsel %vm350, %v336, 0
        %v370 = vsel %vm350, %v337, 0
        %v373 = vsel %vm350, %v338, 0
        %vm375 = vcmask 1044480
        %vm376 = vcmask 1045504
        %v377 = vsel %vm375, 4294967295, 65535
        %v378 = vsel %vm376, %v377, 0
        %v380 = vand.u32 %v348, %v378
        %382 = vmatpush.bf16.msra.mxu0 0
        %383 = vmatpush.bf16.msra.mxu0 0
        %384 = vmatpush.bf16.msra.mxu0 0
        %385 = vmatpush.bf16.msra.mxu0 0
        %386 = vmatpush.bf16.msra.mxu0 0
        %387 = vmatpush.bf16.msra.mxu0 0
        %388 = vmatpush.bf16.msra.mxu0 %v380
        %389 = vmatpush.bf16.msra.mxu0 %v347
        %390 = vmatmul.bf16.gmra.mxu0 %v352
        %v391 = vpop.f32.mrf.mxu0
        %v392 = vadd.f32 %v297, %v391
        %v393 = vpop.f32.mrf.mxu0
        %v394 = vadd.f32 %v297, %v393
        %395 = vmatmul.bf16.gmra.mxu0 %v355
        %v396 = vpop.f32.mrf.mxu0
        %v397 = vadd.f32 %v297, %v396
        %v398 = vpop.f32.mrf.mxu0
        %v399 = vadd.f32 %v297, %v398
        %400 = vmatmul.bf16.gmra.mxu0 %v358
        %v401 = vpop.f32.mrf.mxu0
        %v402 = vadd.f32 %v297, %v401
        %v403 = vpop.f32.mrf.mxu0
        %v404 = vadd.f32 %v297, %v403
        %405 = vmatmul.bf16.gmra.mxu0 %v361
        %v406 = vpop.f32.mrf.mxu0
        %v407 = vadd.f32 %v297, %v406
        %v408 = vpop.f32.mrf.mxu0
        %v409 = vadd.f32 %v297, %v408
        %410 = vmatmul.bf16.gmra.mxu0 %v364
        %v411 = vpop.f32.mrf.mxu0
        %v412 = vadd.f32 %v297, %v411
        %v413 = vpop.f32.mrf.mxu0
        %v414 = vadd.f32 %v297, %v413
        %415 = vmatmul.bf16.gmra.mxu0 %v367
        %v416 = vpop.f32.mrf.mxu0
        %v417 = vadd.f32 %v297, %v416
        %v418 = vpop.f32.mrf.mxu0
        %v419 = vadd.f32 %v297, %v418
        %420 = vmatmul.bf16.gmra.mxu0 %v370
        %v421 = vpop.f32.mrf.mxu0
        %v422 = vadd.f32 %v297, %v421
        %v423 = vpop.f32.mrf.mxu0
        %v424 = vadd.f32 %v297, %v423
        %425 = vmatmul.bf16.gmra.mxu0 %v373
        %v426 = vpop.f32.mrf.mxu0
        %v427 = vadd.f32 %v297, %v426
        %v428 = vpop.f32.mrf.mxu0
        %v429 = vadd.f32 %v297, %v428
        %430 = vdwg.mxu0
        %v431 = vmax.f32 %v392, 0.0
        %v432 = vmax.f32 %v394, 0.0
        %v433 = vmax.f32 %v397, 0.0
        %v434 = vmax.f32 %v399, 0.0
        %v435 = vmax.f32 %v402, 0.0
        %v436 = vmax.f32 %v404, 0.0
        %v437 = vmax.f32 %v407, 0.0
        %v438 = vmax.f32 %v409, 0.0
        %v439 = vmax.f32 %v412, 0.0
        %v440 = vmax.f32 %v414, 0.0
        %v441 = vmax.f32 %v417, 0.0
        %v442 = vmax.f32 %v419, 0.0
        %v443 = vmax.f32 %v422, 0.0
        %v444 = vmax.f32 %v424, 0.0
        %v445 = vmax.f32 %v427, 0.0
        %v446 = vmax.f32 %v429, 0.0
        %v447 = vpack.c.bf16 %v432, %v431
        %v448 = vpack.c.bf16 %v434, %v433
        %v449 = vpack.c.bf16 %v436, %v435
        %v450 = vpack.c.bf16 %v438, %v437
        %v451 = vpack.c.bf16 %v440, %v439
        %v452 = vpack.c.bf16 %v442, %v441
        %v453 = vpack.c.bf16 %v444, %v443
        %v454 = vpack.c.bf16 %v446, %v445
        %v455 = vld [vmem:[%s4] sm:$0xf]
        %v456 = vld [vmem:[%s4 + $0x4] sm:$0xf]
        %v457 = vld [vmem:[%s4 + $0x8] sm:$0xf]
        %v458 = vld [vmem:[%s4 + $0xc] sm:$0xf]
        %v459 = vld [vmem:[%s4 + $0x10] sm:$0xf]
        %v460 = vld [vmem:[%s4 + $0x14] sm:$0xf]
        %v461 = vld [vmem:[%s4 + $0x18] sm:$0xf]
        %v462 = vld [vmem:[%s4 + $0x1c] sm:$0xf]
        %v463 = vld [vmem:[%s4 + $0x20] sm:$0xf]
        %v464 = vld [vmem:[%s4 + $0x24] sm:$0xf]
        %v465 = vld [vmem:[%s4 + $0x28] sm:$0xf]
        %v466 = vld [vmem:[%s4 + $0x2c] sm:$0xf]
        %v467 = vld [vmem:[%s4 + $0x30] sm:$0xf]
        %v468 = vld [vmem:[%s4 + $0x34] sm:$0xf]
        %v469 = vld [vmem:[%s4 + $0x38] sm:$0xf]
        %v470 = vld [vmem:[%s4 + $0x3c] sm:$0xf]
        %v471 = vld [vmem:[%s5] sm:$0x1]
        %v473 = vperm.slane %v471, 0
        %v491 = vunpack.c.l.b16 %v455
        %v492 = vunpack.c.l.b16 %v456
        %v493 = vunpack.c.l.b16 %v457
        %v494 = vunpack.c.l.b16 %v458
        %v495 = vunpack.c.l.b16 %v459
        %v496 = vunpack.c.l.b16 %v460
        %v497 = vunpack.c.l.b16 %v461
        %v498 = vunpack.c.l.b16 %v462
        %v499 = vunpack.c.l.b16 %v463
        %v500 = vunpack.c.l.b16 %v464
        %v501 = vunpack.c.l.b16 %v465
        %v502 = vunpack.c.l.b16 %v466
        %v503 = vunpack.c.l.b16 %v467
        %v504 = vunpack.c.l.b16 %v468
        %v505 = vunpack.c.l.b16 %v469
        %v506 = vunpack.c.l.b16 %v470
        %v507 = vpack.c.b16 %v492, %v491
        %v508 = vpack.c.b16 %v494, %v493
        %v509 = vpack.c.b16 %v496, %v495
        %v510 = vpack.c.b16 %v498, %v497
        %v511 = vpack.c.b16 %v500, %v499
        %v512 = vpack.c.b16 %v502, %v501
        %v513 = vpack.c.b16 %v504, %v503
        %v514 = vpack.c.b16 %v506, %v505
        %523 = vmatpush.bf16.msra.mxu0 %v514
        %524 = vmatpush.bf16.msra.mxu0 %v513
        %525 = vmatpush.bf16.msra.mxu0 %v512
        %526 = vmatpush.bf16.msra.mxu0 %v511
        %527 = vmatpush.bf16.msra.mxu0 %v510
        %528 = vmatpush.bf16.msra.mxu0 %v509
        %529 = vmatpush.bf16.msra.mxu0 %v508
        %530 = vmatpush.bf16.msra.mxu0 %v507
        %531 = vmatmul.bf16.gmra.mxu0 %v447
        %v532 = vpop.f32.mrf.mxu0
        %v533 = vadd.f32 %v473, %v532
        %v534 = vpop.f32.mrf.mxu0
        %v535 = vadd.f32 %v473, %v534
        %536 = vmatmul.bf16.gmra.mxu0 %v448
        %v537 = vpop.f32.mrf.mxu0
        %v538 = vadd.f32 %v473, %v537
        %v539 = vpop.f32.mrf.mxu0
        %v540 = vadd.f32 %v473, %v539
        %541 = vmatmul.bf16.gmra.mxu0 %v449
        %v542 = vpop.f32.mrf.mxu0
        %v543 = vadd.f32 %v473, %v542
        %v544 = vpop.f32.mrf.mxu0
        %v545 = vadd.f32 %v473, %v544
        %546 = vmatmul.bf16.gmra.mxu0 %v450
        %v547 = vpop.f32.mrf.mxu0
        %v548 = vadd.f32 %v473, %v547
        %v549 = vpop.f32.mrf.mxu0
        %v550 = vadd.f32 %v473, %v549
        %551 = vmatmul.bf16.gmra.mxu0 %v451
        %v552 = vpop.f32.mrf.mxu0
        %v553 = vadd.f32 %v473, %v552
        %v554 = vpop.f32.mrf.mxu0
        %v555 = vadd.f32 %v473, %v554
        %556 = vmatmul.bf16.gmra.mxu0 %v452
        %v557 = vpop.f32.mrf.mxu0
        %v558 = vadd.f32 %v473, %v557
        %v559 = vpop.f32.mrf.mxu0
        %v560 = vadd.f32 %v473, %v559
        %561 = vmatmul.bf16.gmra.mxu0 %v453
        %v562 = vpop.f32.mrf.mxu0
        %v563 = vadd.f32 %v473, %v562
        %v564 = vpop.f32.mrf.mxu0
        %v565 = vadd.f32 %v473, %v564
        %566 = vmatmul.bf16.gmra.mxu0 %v454
        %v567 = vpop.f32.mrf.mxu0
        %v568 = vadd.f32 %v473, %v567
        %v569 = vpop.f32.mrf.mxu0
        %v570 = vadd.f32 %v473, %v569
        %571 = vdwg.mxu0
        %572 = vmax.xlane.f32.xlu0 %v533
        %v573 = vpop.xlane.xlu0 %572
        %574 = vmax.xlane.f32.xlu0 %v535
        %v575 = vpop.xlane.xlu0 %574
        %576 = vmax.xlane.f32.xlu0 %v538
        %v577 = vpop.xlane.xlu0 %576
        %578 = vmax.xlane.f32.xlu0 %v540
        %v579 = vpop.xlane.xlu0 %578
        %580 = vmax.xlane.f32.xlu0 %v543
        %v581 = vpop.xlane.xlu0 %580
        %582 = vmax.xlane.f32.xlu0 %v545
        %v583 = vpop.xlane.xlu0 %582
        %584 = vmax.xlane.f32.xlu0 %v548
        %v585 = vpop.xlane.xlu0 %584
        %586 = vmax.xlane.f32.xlu0 %v550
        %v587 = vpop.xlane.xlu0 %586
        %588 = vmax.xlane.f32.xlu0 %v553
        %v589 = vpop.xlane.xlu0 %588
        %590 = vmax.xlane.f32.xlu0 %v555
        %v591 = vpop.xlane.xlu0 %590
        %592 = vmax.xlane.f32.xlu0 %v558
        %v593 = vpop.xlane.xlu0 %592
        %594 = vmax.xlane.f32.xlu0 %v560
        %v595 = vpop.xlane.xlu0 %594
        %596 = vmax.xlane.f32.xlu0 %v563
        %v597 = vpop.xlane.xlu0 %596
        %598 = vmax.xlane.f32.xlu0 %v565
        %v599 = vpop.xlane.xlu0 %598
        %600 = vmax.xlane.f32.xlu0 %v568
        %v601 = vpop.xlane.xlu0 %600
        %602 = vmax.xlane.f32.xlu0 %v570
        %v603 = vpop.xlane.xlu0 %602
        %v604 = vsub.f32 %v533, %v573
        %v605 = vsub.f32 %v535, %v575
        %v606 = vsub.f32 %v538, %v577
        %v607 = vsub.f32 %v540, %v579
        %v608 = vsub.f32 %v543, %v581
        %v609 = vsub.f32 %v545, %v583
        %v610 = vsub.f32 %v548, %v585
        %v611 = vsub.f32 %v550, %v587
        %v612 = vsub.f32 %v553, %v589
        %v613 = vsub.f32 %v555, %v591
        %v614 = vsub.f32 %v558, %v593
        %v615 = vsub.f32 %v560, %v595
        %v616 = vsub.f32 %v563, %v597
        %v617 = vsub.f32 %v565, %v599
        %v618 = vsub.f32 %v568, %v601
        %v619 = vsub.f32 %v570, %v603
        %v620 = vmul.f32 %v604, 1.442695
        %v621 = vpow.pop %v620
        %v622 = vmul.f32 %v605, 1.442695
        %v623 = vpow.pop %v622
        %v624 = vmul.f32 %v606, 1.442695
        %v625 = vpow.pop %v624
        %v626 = vmul.f32 %v607, 1.442695
        %v627 = vpow.pop %v626
        %v628 = vmul.f32 %v608, 1.442695
        %v629 = vpow.pop %v628
        %v630 = vmul.f32 %v609, 1.442695
        %v631 = vpow.pop %v630
        %v632 = vmul.f32 %v610, 1.442695
        %v633 = vpow.pop %v632
        %v634 = vmul.f32 %v611, 1.442695
        %v635 = vpow.pop %v634
        %v636 = vmul.f32 %v612, 1.442695
        %v637 = vpow.pop %v636
        %v638 = vmul.f32 %v613, 1.442695
        %v639 = vpow.pop %v638
        %v640 = vmul.f32 %v614, 1.442695
        %v641 = vpow.pop %v640
        %v642 = vmul.f32 %v615, 1.442695
        %v643 = vpow.pop %v642
        %v644 = vmul.f32 %v616, 1.442695
        %v645 = vpow.pop %v644
        %v646 = vmul.f32 %v617, 1.442695
        %v647 = vpow.pop %v646
        %v648 = vmul.f32 %v618, 1.442695
        %v649 = vpow.pop %v648
        %v650 = vmul.f32 %v619, 1.442695
        %v651 = vpow.pop %v650
        %652 = vadd.xlane.f32.xlu0 %v621
        %v653 = vpop.xlane.xlu0 %652
        %654 = vadd.xlane.f32.xlu0 %v623
        %v655 = vpop.xlane.xlu0 %654
        %656 = vadd.xlane.f32.xlu0 %v625
        %v657 = vpop.xlane.xlu0 %656
        %658 = vadd.xlane.f32.xlu0 %v627
        %v659 = vpop.xlane.xlu0 %658
        %660 = vadd.xlane.f32.xlu0 %v629
        %v661 = vpop.xlane.xlu0 %660
        %662 = vadd.xlane.f32.xlu0 %v631
        %v663 = vpop.xlane.xlu0 %662
        %664 = vadd.xlane.f32.xlu0 %v633
        %v665 = vpop.xlane.xlu0 %664
        %666 = vadd.xlane.f32.xlu0 %v635
        %v667 = vpop.xlane.xlu0 %666
        %668 = vadd.xlane.f32.xlu0 %v637
        %v669 = vpop.xlane.xlu0 %668
        %670 = vadd.xlane.f32.xlu0 %v639
        %v671 = vpop.xlane.xlu0 %670
        %672 = vadd.xlane.f32.xlu0 %v641
        %v673 = vpop.xlane.xlu0 %672
        %674 = vadd.xlane.f32.xlu0 %v643
        %v675 = vpop.xlane.xlu0 %674
        %676 = vadd.xlane.f32.xlu0 %v645
        %v677 = vpop.xlane.xlu0 %676
        %678 = vadd.xlane.f32.xlu0 %v647
        %v679 = vpop.xlane.xlu0 %678
        %680 = vadd.xlane.f32.xlu0 %v649
        %v681 = vpop.xlane.xlu0 %680
        %682 = vadd.xlane.f32.xlu0 %v651
        %v683 = vpop.xlane.xlu0 %682
        %v684 = vlog2.pop %v653
        %v685 = vmul.f32 %v684, 0.6931472
        %v686 = vlog2.pop %v655
        %v687 = vmul.f32 %v686, 0.6931472
        %v688 = vlog2.pop %v657
        %v689 = vmul.f32 %v688, 0.6931472
        %v690 = vlog2.pop %v659
        %v691 = vmul.f32 %v690, 0.6931472
        %v692 = vlog2.pop %v661
        %v693 = vmul.f32 %v692, 0.6931472
        %v694 = vlog2.pop %v663
        %v695 = vmul.f32 %v694, 0.6931472
        %v696 = vlog2.pop %v665
        %v697 = vmul.f32 %v696, 0.6931472
        %v698 = vlog2.pop %v667
        %v699 = vmul.f32 %v698, 0.6931472
        %v700 = vlog2.pop %v669
        %v701 = vmul.f32 %v700, 0.6931472
        %v702 = vlog2.pop %v671
        %v703 = vmul.f32 %v702, 0.6931472
        %v704 = vlog2.pop %v673
        %v705 = vmul.f32 %v704, 0.6931472
        %v706 = vlog2.pop %v675
        %v707 = vmul.f32 %v706, 0.6931472
        %v708 = vlog2.pop %v677
        %v709 = vmul.f32 %v708, 0.6931472
        %v710 = vlog2.pop %v679
        %v711 = vmul.f32 %v710, 0.6931472
        %v712 = vlog2.pop %v681
        %v713 = vmul.f32 %v712, 0.6931472
        %v714 = vlog2.pop %v683
        %v715 = vmul.f32 %v714, 0.6931472
        %v716 = vsub.f32 %v604, %v685
        %v717 = vsub.f32 %v605, %v687
        %v718 = vsub.f32 %v606, %v689
        %v719 = vsub.f32 %v607, %v691
        %v720 = vsub.f32 %v608, %v693
        %v721 = vsub.f32 %v609, %v695
        %v722 = vsub.f32 %v610, %v697
        %v723 = vsub.f32 %v611, %v699
        %v724 = vsub.f32 %v612, %v701
        %v725 = vsub.f32 %v613, %v703
        %v726 = vsub.f32 %v614, %v705
        %v727 = vsub.f32 %v615, %v707
        %v728 = vsub.f32 %v616, %v709
        %v729 = vsub.f32 %v617, %v711
        %v730 = vsub.f32 %v618, %v713
        %v731 = vsub.f32 %v619, %v715
        %v732 = vld [vmem:[%s272] sm:$0xff]
        %v733 = vld [vmem:[%s272 + $0x8] sm:$0xff]
        %v734 = vld [vmem:[%s272 + $0x10] sm:$0xff]
        %v735 = vld [vmem:[%s272 + $0x18] sm:$0xff]
        %v736 = vld [vmem:[%s272 + $0x20] sm:$0xff]
        %v737 = vld [vmem:[%s272 + $0x28] sm:$0xff]
        %v738 = vld [vmem:[%s272 + $0x30] sm:$0xff]
        %v739 = vld [vmem:[%s272 + $0x38] sm:$0xff]
        %v740 = vld [vmem:[%s272 + $0x40] sm:$0xff]
        %v741 = vld [vmem:[%s272 + $0x48] sm:$0xff]
        %v742 = vld [vmem:[%s272 + $0x50] sm:$0xff]
        %v743 = vld [vmem:[%s272 + $0x58] sm:$0xff]
        %v744 = vld [vmem:[%s272 + $0x60] sm:$0xff]
        %v745 = vld [vmem:[%s272 + $0x68] sm:$0xff]
        %v746 = vld [vmem:[%s272 + $0x70] sm:$0xff]
        %v747 = vld [vmem:[%s272 + $0x78] sm:$0xff]
        %v748 = vlaneseq
        %v749 = vand.u32 %v748, 127
        %750 = vset.pattern.permute.xlu0 0
        %751 = vperm.xlu0 %750, %v732
        %v752 = vpop.permute.xlu0 %751
        %753 = vset.pattern.permute.xlu0 0
        %754 = vperm.xlu0 %753, %v733
        %v755 = vpop.permute.xlu0 %754
        %756 = vset.pattern.permute.xlu0 0
        %757 = vperm.xlu0 %756, %v734
        %v758 = vpop.permute.xlu0 %757
        %759 = vset.pattern.permute.xlu0 0
        %760 = vperm.xlu0 %759, %v735
        %v761 = vpop.permute.xlu0 %760
        %762 = vset.pattern.permute.xlu0 0
        %763 = vperm.xlu0 %762, %v736
        %v764 = vpop.permute.xlu0 %763
        %765 = vset.pattern.permute.xlu0 0
        %766 = vperm.xlu0 %765, %v737
        %v767 = vpop.permute.xlu0 %766
        %768 = vset.pattern.permute.xlu0 0
        %769 = vperm.xlu0 %768, %v738
        %v770 = vpop.permute.xlu0 %769
        %771 = vset.pattern.permute.xlu0 0
        %772 = vperm.xlu0 %771, %v739
        %v773 = vpop.permute.xlu0 %772
        %774 = vset.pattern.permute.xlu0 0
        %775 = vperm.xlu0 %774, %v740
        %v776 = vpop.permute.xlu0 %775
        %777 = vset.pattern.permute.xlu0 0
        %778 = vperm.xlu0 %777, %v741
        %v779 = vpop.permute.xlu0 %778
        %780 = vset.pattern.permute.xlu0 0
        %781 = vperm.xlu0 %780, %v742
        %v782 = vpop.permute.xlu0 %781
        %783 = vset.pattern.permute.xlu0 0
        %784 = vperm.xlu0 %783, %v743
        %v785 = vpop.permute.xlu0 %784
        %786 = vset.pattern.permute.xlu0 0
        %787 = vperm.xlu0 %786, %v744
        %v788 = vpop.permute.xlu0 %787
        %789 = vset.pattern.permute.xlu0 0
        %790 = vperm.xlu0 %789, %v745
        %v791 = vpop.permute.xlu0 %790
        %792 = vset.pattern.permute.xlu0 0
        %793 = vperm.xlu0 %792, %v746
        %v794 = vpop.permute.xlu0 %793
        %795 = vset.pattern.permute.xlu0 0
        %796 = vperm.xlu0 %795, %v747
        %v797 = vpop.permute.xlu0 %796
        %vm798 = vcmp.eq.s32.totalorder %v749, %v752
        %vm799 = vcmp.eq.s32.totalorder %v749, %v755
        %vm800 = vcmp.eq.s32.totalorder %v749, %v758
        %vm801 = vcmp.eq.s32.totalorder %v749, %v761
        %vm802 = vcmp.eq.s32.totalorder %v749, %v764
        %vm803 = vcmp.eq.s32.totalorder %v749, %v767
        %vm804 = vcmp.eq.s32.totalorder %v749, %v770
        %vm805 = vcmp.eq.s32.totalorder %v749, %v773
        %vm806 = vcmp.eq.s32.totalorder %v749, %v776
        %vm807 = vcmp.eq.s32.totalorder %v749, %v779
        %vm808 = vcmp.eq.s32.totalorder %v749, %v782
        %vm809 = vcmp.eq.s32.totalorder %v749, %v785
        %vm810 = vcmp.eq.s32.totalorder %v749, %v788
        %vm811 = vcmp.eq.s32.totalorder %v749, %v791
        %vm812 = vcmp.eq.s32.totalorder %v749, %v794
        %vm813 = vcmp.eq.s32.totalorder %v749, %v797
        %vm814 = vcmp.ge.s32.totalorder %v732, 0
        %vm815 = vcmp.ge.s32.totalorder %v733, 0
        %vm816 = vcmp.ge.s32.totalorder %v734, 0
        %vm817 = vcmp.ge.s32.totalorder %v735, 0
        %vm818 = vcmp.ge.s32.totalorder %v736, 0
        %vm819 = vcmp.ge.s32.totalorder %v737, 0
        %vm820 = vcmp.ge.s32.totalorder %v738, 0
        %vm821 = vcmp.ge.s32.totalorder %v739, 0
        %vm822 = vcmp.ge.s32.totalorder %v740, 0
        %vm823 = vcmp.ge.s32.totalorder %v741, 0
        %vm824 = vcmp.ge.s32.totalorder %v742, 0
        %vm825 = vcmp.ge.s32.totalorder %v743, 0
        %vm826 = vcmp.ge.s32.totalorder %v744, 0
        %vm827 = vcmp.ge.s32.totalorder %v745, 0
        %vm828 = vcmp.ge.s32.totalorder %v746, 0
        %vm829 = vcmp.ge.s32.totalorder %v747, 0
        %v830 = vsel %vm814, 1, 0
        %v831 = vsel %vm815, 1, 0
        %v832 = vsel %vm816, 1, 0
        %v833 = vsel %vm817, 1, 0
        %v834 = vsel %vm818, 1, 0
        %v835 = vsel %vm819, 1, 0
        %v836 = vsel %vm820, 1, 0
        %v837 = vsel %vm821, 1, 0
        %v838 = vsel %vm822, 1, 0
        %v839 = vsel %vm823, 1, 0
        %v840 = vsel %vm824, 1, 0
        %v841 = vsel %vm825, 1, 0
        %v842 = vsel %vm826, 1, 0
        %v843 = vsel %vm827, 1, 0
        %v844 = vsel %vm828, 1, 0
        %v845 = vsel %vm829, 1, 0
        %v846 = vcvt.s32.f32 %v830
        %v847 = vcvt.s32.f32 %v831
        %v848 = vcvt.s32.f32 %v832
        %v849 = vcvt.s32.f32 %v833
        %v850 = vcvt.s32.f32 %v834
        %v851 = vcvt.s32.f32 %v835
        %v852 = vcvt.s32.f32 %v836
        %v853 = vcvt.s32.f32 %v837
        %v854 = vcvt.s32.f32 %v838
        %v855 = vcvt.s32.f32 %v839
        %v856 = vcvt.s32.f32 %v840
        %v857 = vcvt.s32.f32 %v841
        %v858 = vcvt.s32.f32 %v842
        %v859 = vcvt.s32.f32 %v843
        %v860 = vcvt.s32.f32 %v844
        %v861 = vcvt.s32.f32 %v845
        %v862 = vsel %vm798, %v716, 0.0
        %v863 = vsel %vm799, %v717, 0.0
        %v864 = vsel %vm800, %v718, 0.0
        %v865 = vsel %vm801, %v719, 0.0
        %v866 = vsel %vm802, %v720, 0.0
        %v867 = vsel %vm803, %v721, 0.0
        %v868 = vsel %vm804, %v722, 0.0
        %v869 = vsel %vm805, %v723, 0.0
        %v870 = vsel %vm806, %v724, 0.0
        %v871 = vsel %vm807, %v725, 0.0
        %v872 = vsel %vm808, %v726, 0.0
        %v873 = vsel %vm809, %v727, 0.0
        %v874 = vsel %vm810, %v728, 0.0
        %v875 = vsel %vm811, %v729, 0.0
        %v876 = vsel %vm812, %v730, 0.0
        %v877 = vsel %vm813, %v731, 0.0
        %878 = vadd.xlane.f32.xlu0 %v862
        %v879 = vpop.xlane.xlu0 %878
        %880 = vadd.xlane.f32.xlu0 %v863
        %v881 = vpop.xlane.xlu0 %880
        %882 = vadd.xlane.f32.xlu0 %v864
        %v883 = vpop.xlane.xlu0 %882
        %884 = vadd.xlane.f32.xlu0 %v865
        %v885 = vpop.xlane.xlu0 %884
        %886 = vadd.xlane.f32.xlu0 %v866
        %v887 = vpop.xlane.xlu0 %886
        %888 = vadd.xlane.f32.xlu0 %v867
        %v889 = vpop.xlane.xlu0 %888
        %890 = vadd.xlane.f32.xlu0 %v868
        %v891 = vpop.xlane.xlu0 %890
        %892 = vadd.xlane.f32.xlu0 %v869
        %v893 = vpop.xlane.xlu0 %892
        %894 = vadd.xlane.f32.xlu0 %v870
        %v895 = vpop.xlane.xlu0 %894
        %896 = vadd.xlane.f32.xlu0 %v871
        %v897 = vpop.xlane.xlu0 %896
        %898 = vadd.xlane.f32.xlu0 %v872
        %v899 = vpop.xlane.xlu0 %898
        %900 = vadd.xlane.f32.xlu0 %v873
        %v901 = vpop.xlane.xlu0 %900
        %902 = vadd.xlane.f32.xlu0 %v874
        %v903 = vpop.xlane.xlu0 %902
        %904 = vadd.xlane.f32.xlu0 %v875
        %v905 = vpop.xlane.xlu0 %904
        %906 = vadd.xlane.f32.xlu0 %v876
        %v907 = vpop.xlane.xlu0 %906
        %908 = vadd.xlane.f32.xlu0 %v877
        %v909 = vpop.xlane.xlu0 %908
        %vm910 = vcmp.eq.f32.partialorder %v533, %v573
        %vm911 = vcmp.eq.f32.partialorder %v535, %v575
        %vm912 = vcmp.eq.f32.partialorder %v538, %v577
        %vm913 = vcmp.eq.f32.partialorder %v540, %v579
        %vm914 = vcmp.eq.f32.partialorder %v543, %v581
        %vm915 = vcmp.eq.f32.partialorder %v545, %v583
        %vm916 = vcmp.eq.f32.partialorder %v548, %v585
        %vm917 = vcmp.eq.f32.partialorder %v550, %v587
        %vm918 = vcmp.eq.f32.partialorder %v553, %v589
        %vm919 = vcmp.eq.f32.partialorder %v555, %v591
        %vm920 = vcmp.eq.f32.partialorder %v558, %v593
        %vm921 = vcmp.eq.f32.partialorder %v560, %v595
        %vm922 = vcmp.eq.f32.partialorder %v563, %v597
        %vm923 = vcmp.eq.f32.partialorder %v565, %v599
        %vm924 = vcmp.eq.f32.partialorder %v568, %v601
        %vm925 = vcmp.eq.f32.partialorder %v570, %v603
        %v926 = vsel %vm910, %v749, 128
        %v927 = vsel %vm911, %v749, 128
        %v928 = vsel %vm912, %v749, 128
        %v929 = vsel %vm913, %v749, 128
        %v930 = vsel %vm914, %v749, 128
        %v931 = vsel %vm915, %v749, 128
        %v932 = vsel %vm916, %v749, 128
        %v933 = vsel %vm917, %v749, 128
        %v934 = vsel %vm918, %v749, 128
        %v935 = vsel %vm919, %v749, 128
        %v936 = vsel %vm920, %v749, 128
        %v937 = vsel %vm921, %v749, 128
        %v938 = vsel %vm922, %v749, 128
        %v939 = vsel %vm923, %v749, 128
        %v940 = vsel %vm924, %v749, 128
        %v941 = vsel %vm925, %v749, 128
        %v942 = vand.u32 %v926, 65535
        %v943 = vshra.s32 %v926, 16
        %v944 = vcvt.s32.f32 %v942
        %v945 = vcvt.s32.f32 %v943
        %946 = vmin.xlane.f32.xlu0 %v945
        %v947 = vpop.xlane.xlu0 %946
        %vm948 = vcmp.eq.f32.partialorder %v945, %v947
        %v949 = vsel %vm948, %v944, inf
        %950 = vmin.xlane.f32.xlu0 %v949
        %v951 = vpop.xlane.xlu0 %950
        %v952 = vcvt.f32.s32 %v951
        %v953 = vcvt.f32.s32 %v947
        %v954 = vshll.u32 %v953, 16
        %v955 = vadd.s32 %v954, %v952
        %v956 = vand.u32 %v927, 65535
        %v957 = vshra.s32 %v927, 16
        %v958 = vcvt.s32.f32 %v956
        %v959 = vcvt.s32.f32 %v957
        %960 = vmin.xlane.f32.xlu0 %v959
        %v961 = vpop.xlane.xlu0 %960
        %vm962 = vcmp.eq.f32.partialorder %v959, %v961
        %v963 = vsel %vm962, %v958, inf
        %964 = vmin.xlane.f32.xlu0 %v963
        %v965 = vpop.xlane.xlu0 %964
        %v966 = vcvt.f32.s32 %v965
        %v967 = vcvt.f32.s32 %v961
        %v968 = vshll.u32 %v967, 16
        %v969 = vadd.s32 %v968, %v966
        %v970 = vand.u32 %v928, 65535
        %v971 = vshra.s32 %v928, 16
        %v972 = vcvt.s32.f32 %v970
        %v973 = vcvt.s32.f32 %v971
        %974 = vmin.xlane.f32.xlu0 %v973
        %v975 = vpop.xlane.xlu0 %974
        %vm976 = vcmp.eq.f32.partialorder %v973, %v975
        %v977 = vsel %vm976, %v972, inf
        %978 = vmin.xlane.f32.xlu0 %v977
        %v979 = vpop.xlane.xlu0 %978
        %v980 = vcvt.f32.s32 %v979
        %v981 = vcvt.f32.s32 %v975
        %v982 = vshll.u32 %v981, 16
        %v983 = vadd.s32 %v982, %v980
        %v984 = vand.u32 %v929, 65535
        %v985 = vshra.s32 %v929, 16
        %v986 = vcvt.s32.f32 %v984
        %v987 = vcvt.s32.f32 %v985
        %988 = vmin.xlane.f32.xlu0 %v987
        %v989 = vpop.xlane.xlu0 %988
        %vm990 = vcmp.eq.f32.partialorder %v987, %v989
        %v991 = vsel %vm990, %v986, inf
        %992 = vmin.xlane.f32.xlu0 %v991
        %v993 = vpop.xlane.xlu0 %992
        %v994 = vcvt.f32.s32 %v993
        %v995 = vcvt.f32.s32 %v989
        %v996 = vshll.u32 %v995, 16
        %v997 = vadd.s32 %v996, %v994
        %v998 = vand.u32 %v930, 65535
        %v999 = vshra.s32 %v930, 16
        %v1000 = vcvt.s32.f32 %v998
        %v1001 = vcvt.s32.f32 %v999
        %1002 = vmin.xlane.f32.xlu0 %v1001
        %v1003 = vpop.xlane.xlu0 %1002
        %vm1004 = vcmp.eq.f32.partialorder %v1001, %v1003
        %v1005 = vsel %vm1004, %v1000, inf
        %1006 = vmin.xlane.f32.xlu0 %v1005
        %v1007 = vpop.xlane.xlu0 %1006
        %v1008 = vcvt.f32.s32 %v1007
        %v1009 = vcvt.f32.s32 %v1003
        %v1010 = vshll.u32 %v1009, 16
        %v1011 = vadd.s32 %v1010, %v1008
        %v1012 = vand.u32 %v931, 65535
        %v1013 = vshra.s32 %v931, 16
        %v1014 = vcvt.s32.f32 %v1012
        %v1015 = vcvt.s32.f32 %v1013
        %1016 = vmin.xlane.f32.xlu0 %v1015
        %v1017 = vpop.xlane.xlu0 %1016
        %vm1018 = vcmp.eq.f32.partialorder %v1015, %v1017
        %v1019 = vsel %vm1018, %v1014, inf
        %1020 = vmin.xlane.f32.xlu0 %v1019
        %v1021 = vpop.xlane.xlu0 %1020
        %v1022 = vcvt.f32.s32 %v1021
        %v1023 = vcvt.f32.s32 %v1017
        %v1024 = vshll.u32 %v1023, 16
        %v1025 = vadd.s32 %v1024, %v1022
        %v1026 = vand.u32 %v932, 65535
        %v1027 = vshra.s32 %v932, 16
        %v1028 = vcvt.s32.f32 %v1026
        %v1029 = vcvt.s32.f32 %v1027
        %1030 = vmin.xlane.f32.xlu0 %v1029
        %v1031 = vpop.xlane.xlu0 %1030
        %vm1032 = vcmp.eq.f32.partialorder %v1029, %v1031
        %v1033 = vsel %vm1032, %v1028, inf
        %1034 = vmin.xlane.f32.xlu0 %v1033
        %v1035 = vpop.xlane.xlu0 %1034
        %v1036 = vcvt.f32.s32 %v1035
        %v1037 = vcvt.f32.s32 %v1031
        %v1038 = vshll.u32 %v1037, 16
        %v1039 = vadd.s32 %v1038, %v1036
        %v1040 = vand.u32 %v933, 65535
        %v1041 = vshra.s32 %v933, 16
        %v1042 = vcvt.s32.f32 %v1040
        %v1043 = vcvt.s32.f32 %v1041
        %1044 = vmin.xlane.f32.xlu0 %v1043
        %v1045 = vpop.xlane.xlu0 %1044
        %vm1046 = vcmp.eq.f32.partialorder %v1043, %v1045
        %v1047 = vsel %vm1046, %v1042, inf
        %1048 = vmin.xlane.f32.xlu0 %v1047
        %v1049 = vpop.xlane.xlu0 %1048
        %v1050 = vcvt.f32.s32 %v1049
        %v1051 = vcvt.f32.s32 %v1045
        %v1052 = vshll.u32 %v1051, 16
        %v1053 = vadd.s32 %v1052, %v1050
        %v1054 = vand.u32 %v934, 65535
        %v1055 = vshra.s32 %v934, 16
        %v1056 = vcvt.s32.f32 %v1054
        %v1057 = vcvt.s32.f32 %v1055
        %1058 = vmin.xlane.f32.xlu0 %v1057
        %v1059 = vpop.xlane.xlu0 %1058
        %vm1060 = vcmp.eq.f32.partialorder %v1057, %v1059
        %v1061 = vsel %vm1060, %v1056, inf
        %1062 = vmin.xlane.f32.xlu0 %v1061
        %v1063 = vpop.xlane.xlu0 %1062
        %v1064 = vcvt.f32.s32 %v1063
        %v1065 = vcvt.f32.s32 %v1059
        %v1066 = vshll.u32 %v1065, 16
        %v1067 = vadd.s32 %v1066, %v1064
        %v1068 = vand.u32 %v935, 65535
        %v1069 = vshra.s32 %v935, 16
        %v1070 = vcvt.s32.f32 %v1068
        %v1071 = vcvt.s32.f32 %v1069
        %1072 = vmin.xlane.f32.xlu0 %v1071
        %v1073 = vpop.xlane.xlu0 %1072
        %vm1074 = vcmp.eq.f32.partialorder %v1071, %v1073
        %v1075 = vsel %vm1074, %v1070, inf
        %1076 = vmin.xlane.f32.xlu0 %v1075
        %v1077 = vpop.xlane.xlu0 %1076
        %v1078 = vcvt.f32.s32 %v1077
        %v1079 = vcvt.f32.s32 %v1073
        %v1080 = vshll.u32 %v1079, 16
        %v1081 = vadd.s32 %v1080, %v1078
        %v1082 = vand.u32 %v936, 65535
        %v1083 = vshra.s32 %v936, 16
        %v1084 = vcvt.s32.f32 %v1082
        %v1085 = vcvt.s32.f32 %v1083
        %1086 = vmin.xlane.f32.xlu0 %v1085
        %v1087 = vpop.xlane.xlu0 %1086
        %vm1088 = vcmp.eq.f32.partialorder %v1085, %v1087
        %v1089 = vsel %vm1088, %v1084, inf
        %1090 = vmin.xlane.f32.xlu0 %v1089
        %v1091 = vpop.xlane.xlu0 %1090
        %v1092 = vcvt.f32.s32 %v1091
        %v1093 = vcvt.f32.s32 %v1087
        %v1094 = vshll.u32 %v1093, 16
        %v1095 = vadd.s32 %v1094, %v1092
        %v1096 = vand.u32 %v937, 65535
        %v1097 = vshra.s32 %v937, 16
        %v1098 = vcvt.s32.f32 %v1096
        %v1099 = vcvt.s32.f32 %v1097
        %1100 = vmin.xlane.f32.xlu0 %v1099
        %v1101 = vpop.xlane.xlu0 %1100
        %vm1102 = vcmp.eq.f32.partialorder %v1099, %v1101
        %v1103 = vsel %vm1102, %v1098, inf
        %1104 = vmin.xlane.f32.xlu0 %v1103
        %v1105 = vpop.xlane.xlu0 %1104
        %v1106 = vcvt.f32.s32 %v1105
        %v1107 = vcvt.f32.s32 %v1101
        %v1108 = vshll.u32 %v1107, 16
        %v1109 = vadd.s32 %v1108, %v1106
        %v1110 = vand.u32 %v938, 65535
        %v1111 = vshra.s32 %v938, 16
        %v1112 = vcvt.s32.f32 %v1110
        %v1113 = vcvt.s32.f32 %v1111
        %1114 = vmin.xlane.f32.xlu0 %v1113
        %v1115 = vpop.xlane.xlu0 %1114
        %vm1116 = vcmp.eq.f32.partialorder %v1113, %v1115
        %v1117 = vsel %vm1116, %v1112, inf
        %1118 = vmin.xlane.f32.xlu0 %v1117
        %v1119 = vpop.xlane.xlu0 %1118
        %v1120 = vcvt.f32.s32 %v1119
        %v1121 = vcvt.f32.s32 %v1115
        %v1122 = vshll.u32 %v1121, 16
        %v1123 = vadd.s32 %v1122, %v1120
        %v1124 = vand.u32 %v939, 65535
        %v1125 = vshra.s32 %v939, 16
        %v1126 = vcvt.s32.f32 %v1124
        %v1127 = vcvt.s32.f32 %v1125
        %1128 = vmin.xlane.f32.xlu0 %v1127
        %v1129 = vpop.xlane.xlu0 %1128
        %vm1130 = vcmp.eq.f32.partialorder %v1127, %v1129
        %v1131 = vsel %vm1130, %v1126, inf
        %1132 = vmin.xlane.f32.xlu0 %v1131
        %v1133 = vpop.xlane.xlu0 %1132
        %v1134 = vcvt.f32.s32 %v1133
        %v1135 = vcvt.f32.s32 %v1129
        %v1136 = vshll.u32 %v1135, 16
        %v1137 = vadd.s32 %v1136, %v1134
        %v1138 = vand.u32 %v940, 65535
        %v1139 = vshra.s32 %v940, 16
        %v1140 = vcvt.s32.f32 %v1138
        %v1141 = vcvt.s32.f32 %v1139
        %1142 = vmin.xlane.f32.xlu0 %v1141
        %v1143 = vpop.xlane.xlu0 %1142
        %vm1144 = vcmp.eq.f32.partialorder %v1141, %v1143
        %v1145 = vsel %vm1144, %v1140, inf
        %1146 = vmin.xlane.f32.xlu0 %v1145
        %v1147 = vpop.xlane.xlu0 %1146
        %v1148 = vcvt.f32.s32 %v1147
        %v1149 = vcvt.f32.s32 %v1143
        %v1150 = vshll.u32 %v1149, 16
        %v1151 = vadd.s32 %v1150, %v1148
        %v1152 = vand.u32 %v941, 65535
        %v1153 = vshra.s32 %v941, 16
        %v1154 = vcvt.s32.f32 %v1152
        %v1155 = vcvt.s32.f32 %v1153
        %1156 = vmin.xlane.f32.xlu0 %v1155
        %v1157 = vpop.xlane.xlu0 %1156
        %vm1158 = vcmp.eq.f32.partialorder %v1155, %v1157
        %v1159 = vsel %vm1158, %v1154, inf
        %1160 = vmin.xlane.f32.xlu0 %v1159
        %v1161 = vpop.xlane.xlu0 %1160
        %v1162 = vcvt.f32.s32 %v1161
        %v1163 = vcvt.f32.s32 %v1157
        %v1164 = vshll.u32 %v1163, 16
        %v1165 = vadd.s32 %v1164, %v1162
        %vm1166 = vcmp.eq.s32.totalorder %v955, %v732
        %vm1167 = vcmp.eq.s32.totalorder %v969, %v733
        %vm1168 = vcmp.eq.s32.totalorder %v983, %v734
        %vm1169 = vcmp.eq.s32.totalorder %v997, %v735
        %vm1170 = vcmp.eq.s32.totalorder %v1011, %v736
        %vm1171 = vcmp.eq.s32.totalorder %v1025, %v737
        %vm1172 = vcmp.eq.s32.totalorder %v1039, %v738
        %vm1173 = vcmp.eq.s32.totalorder %v1053, %v739
        %vm1174 = vcmp.eq.s32.totalorder %v1067, %v740
        %vm1175 = vcmp.eq.s32.totalorder %v1081, %v741
        %vm1176 = vcmp.eq.s32.totalorder %v1095, %v742
        %vm1177 = vcmp.eq.s32.totalorder %v1109, %v743
        %vm1178 = vcmp.eq.s32.totalorder %v1123, %v744
        %vm1179 = vcmp.eq.s32.totalorder %v1137, %v745
        %vm1180 = vcmp.eq.s32.totalorder %v1151, %v746
        %vm1181 = vcmp.eq.s32.totalorder %v1165, %v747
        %vm1182 = vmand %vm1166, %vm814
        %vm1183 = vmand %vm1167, %vm815
        %vm1184 = vmand %vm1168, %vm816
        %vm1185 = vmand %vm1169, %vm817
        %vm1186 = vmand %vm1170, %vm818
        %vm1187 = vmand %vm1171, %vm819
        %vm1188 = vmand %vm1172, %vm820
        %vm1189 = vmand %vm1173, %vm821
        %vm1190 = vmand %vm1174, %vm822
        %vm1191 = vmand %vm1175, %vm823
        %vm1192 = vmand %vm1176, %vm824
        %vm1193 = vmand %vm1177, %vm825
        %vm1194 = vmand %vm1178, %vm826
        %vm1195 = vmand %vm1179, %vm827
        %vm1196 = vmand %vm1180, %vm828
        %vm1197 = vmand %vm1181, %vm829
        %v1198 = vsel %vm1182, 1, 0
        %v1199 = vsel %vm1183, 1, 0
        %v1200 = vsel %vm1184, 1, 0
        %v1201 = vsel %vm1185, 1, 0
        %v1202 = vsel %vm1186, 1, 0
        %v1203 = vsel %vm1187, 1, 0
        %v1204 = vsel %vm1188, 1, 0
        %v1205 = vsel %vm1189, 1, 0
        %v1206 = vsel %vm1190, 1, 0
        %v1207 = vsel %vm1191, 1, 0
        %v1208 = vsel %vm1192, 1, 0
        %v1209 = vsel %vm1193, 1, 0
        %v1210 = vsel %vm1194, 1, 0
        %v1211 = vsel %vm1195, 1, 0
        %v1212 = vsel %vm1196, 1, 0
        %v1213 = vsel %vm1197, 1, 0
        %v1214 = vcvt.s32.f32 %v1198
        %v1215 = vcvt.s32.f32 %v1199
        %v1216 = vcvt.s32.f32 %v1200
        %v1217 = vcvt.s32.f32 %v1201
        %v1218 = vcvt.s32.f32 %v1202
        %v1219 = vcvt.s32.f32 %v1203
        %v1220 = vcvt.s32.f32 %v1204
        %v1221 = vcvt.s32.f32 %v1205
        %v1222 = vcvt.s32.f32 %v1206
        %v1223 = vcvt.s32.f32 %v1207
        %v1224 = vcvt.s32.f32 %v1208
        %v1225 = vcvt.s32.f32 %v1209
        %v1226 = vcvt.s32.f32 %v1210
        %v1227 = vcvt.s32.f32 %v1211
        %v1228 = vcvt.s32.f32 %v1212
        %v1229 = vcvt.s32.f32 %v1213
        %vm1230 = vcmp.eq.s32.totalorder %v749, 0
        %v1231 = vsub.f32 0.0, %v879
        %v1232 = vsub.f32 0.0, %v881
        %v1233 = vsub.f32 0.0, %v883
        %v1234 = vsub.f32 0.0, %v885
        %v1235 = vsub.f32 0.0, %v887
        %v1236 = vsub.f32 0.0, %v889
        %v1237 = vsub.f32 0.0, %v891
        %v1238 = vsub.f32 0.0, %v893
        %v1239 = vsub.f32 0.0, %v895
        %v1240 = vsub.f32 0.0, %v897
        %v1241 = vsub.f32 0.0, %v899
        %v1242 = vsub.f32 0.0, %v901
        %v1243 = vsub.f32 0.0, %v903
        %v1244 = vsub.f32 0.0, %v905
        %v1245 = vsub.f32 0.0, %v907
        %v1246 = vsub.f32 0.0, %v909
        %v1247 = vmul.f32 %v1231, %v846
        %v1248 = vmul.f32 %v1232, %v847
        %v1249 = vmul.f32 %v1233, %v848
        %v1250 = vmul.f32 %v1234, %v849
        %v1251 = vmul.f32 %v1235, %v850
        %v1252 = vmul.f32 %v1236, %v851
        %v1253 = vmul.f32 %v1237, %v852
        %v1254 = vmul.f32 %v1238, %v853
        %v1255 = vmul.f32 %v1239, %v854
        %v1256 = vmul.f32 %v1240, %v855
        %v1257 = vmul.f32 %v1241, %v856
        %v1258 = vmul.f32 %v1242, %v857
        %v1259 = vmul.f32 %v1243, %v858
        %v1260 = vmul.f32 %v1244, %v859
        %v1261 = vmul.f32 %v1245, %v860
        %v1262 = vmul.f32 %v1246, %v861
        %1264 = vset.pattern.permute.xlu0 0
        %1265 = vperm.xlu0 %1264, %v1247
        %v1266 = vpop.permute.xlu0 %1265
        %1269 = vset.pattern.permute.xlu0 0
        %1270 = vperm.xlu0 %1269, %v1248
        %v1271 = vpop.permute.xlu0 %1270
        %1274 = vset.pattern.permute.xlu0 0
        %1275 = vperm.xlu0 %1274, %v1249
        %v1276 = vpop.permute.xlu0 %1275
        %1279 = vset.pattern.permute.xlu0 0
        %1280 = vperm.xlu0 %1279, %v1250
        %v1281 = vpop.permute.xlu0 %1280
        %1284 = vset.pattern.permute.xlu0 0
        %1285 = vperm.xlu0 %1284, %v1251
        %v1286 = vpop.permute.xlu0 %1285
        %1289 = vset.pattern.permute.xlu0 0
        %1290 = vperm.xlu0 %1289, %v1252
        %v1291 = vpop.permute.xlu0 %1290
        %1294 = vset.pattern.permute.xlu0 0
        %1295 = vperm.xlu0 %1294, %v1253
        %v1296 = vpop.permute.xlu0 %1295
        %1299 = vset.pattern.permute.xlu0 0
        %1300 = vperm.xlu0 %1299, %v1254
        %v1301 = vpop.permute.xlu0 %1300
        %1304 = vset.pattern.permute.xlu0 0
        %1305 = vperm.xlu0 %1304, %v1255
        %v1306 = vpop.permute.xlu0 %1305
        %1309 = vset.pattern.permute.xlu0 0
        %1310 = vperm.xlu0 %1309, %v1256
        %v1311 = vpop.permute.xlu0 %1310
        %1314 = vset.pattern.permute.xlu0 0
        %1315 = vperm.xlu0 %1314, %v1257
        %v1316 = vpop.permute.xlu0 %1315
        %1319 = vset.pattern.permute.xlu0 0
        %1320 = vperm.xlu0 %1319, %v1258
        %v1321 = vpop.permute.xlu0 %1320
        %1324 = vset.pattern.permute.xlu0 0
        %1325 = vperm.xlu0 %1324, %v1259
        %v1326 = vpop.permute.xlu0 %1325
        %1329 = vset.pattern.permute.xlu0 0
        %1330 = vperm.xlu0 %1329, %v1260
        %v1331 = vpop.permute.xlu0 %1330
        %1334 = vset.pattern.permute.xlu0 0
        %1335 = vperm.xlu0 %1334, %v1261
        %v1336 = vpop.permute.xlu0 %1335
        %1339 = vset.pattern.permute.xlu0 0
        %1340 = vperm.xlu0 %1339, %v1262
        %v1341 = vpop.permute.xlu0 %1340
        %v1343 = vsel %vm1230, %v1266, 0.0
        %v1344 = vsel %vm1230, %v1271, 0.0
        %v1345 = vsel %vm1230, %v1276, 0.0
        %v1346 = vsel %vm1230, %v1281, 0.0
        %v1347 = vsel %vm1230, %v1286, 0.0
        %v1348 = vsel %vm1230, %v1291, 0.0
        %v1349 = vsel %vm1230, %v1296, 0.0
        %v1350 = vsel %vm1230, %v1301, 0.0
        %v1351 = vsel %vm1230, %v1306, 0.0
        %v1352 = vsel %vm1230, %v1311, 0.0
        %v1353 = vsel %vm1230, %v1316, 0.0
        %v1354 = vsel %vm1230, %v1321, 0.0
        %v1355 = vsel %vm1230, %v1326, 0.0
        %v1356 = vsel %vm1230, %v1331, 0.0
        %v1357 = vsel %vm1230, %v1336, 0.0
        %v1358 = vsel %vm1230, %v1341, 0.0
        %vm1359 = vcmp.eq.s32.totalorder %v749, 1
        %1361 = vset.pattern.permute.xlu0 0
        %1362 = vperm.xlu0 %1361, %v846
        %v1363 = vpop.permute.xlu0 %1362
        %1366 = vset.pattern.permute.xlu0 0
        %1367 = vperm.xlu0 %1366, %v847
        %v1368 = vpop.permute.xlu0 %1367
        %1371 = vset.pattern.permute.xlu0 0
        %1372 = vperm.xlu0 %1371, %v848
        %v1373 = vpop.permute.xlu0 %1372
        %1376 = vset.pattern.permute.xlu0 0
        %1377 = vperm.xlu0 %1376, %v849
        %v1378 = vpop.permute.xlu0 %1377
        %1381 = vset.pattern.permute.xlu0 0
        %1382 = vperm.xlu0 %1381, %v850
        %v1383 = vpop.permute.xlu0 %1382
        %1386 = vset.pattern.permute.xlu0 0
        %1387 = vperm.xlu0 %1386, %v851
        %v1388 = vpop.permute.xlu0 %1387
        %1391 = vset.pattern.permute.xlu0 0
        %1392 = vperm.xlu0 %1391, %v852
        %v1393 = vpop.permute.xlu0 %1392
        %1396 = vset.pattern.permute.xlu0 0
        %1397 = vperm.xlu0 %1396, %v853
        %v1398 = vpop.permute.xlu0 %1397
        %1401 = vset.pattern.permute.xlu0 0
        %1402 = vperm.xlu0 %1401, %v854
        %v1403 = vpop.permute.xlu0 %1402
        %1406 = vset.pattern.permute.xlu0 0
        %1407 = vperm.xlu0 %1406, %v855
        %v1408 = vpop.permute.xlu0 %1407
        %1411 = vset.pattern.permute.xlu0 0
        %1412 = vperm.xlu0 %1411, %v856
        %v1413 = vpop.permute.xlu0 %1412
        %1416 = vset.pattern.permute.xlu0 0
        %1417 = vperm.xlu0 %1416, %v857
        %v1418 = vpop.permute.xlu0 %1417
        %1421 = vset.pattern.permute.xlu0 0
        %1422 = vperm.xlu0 %1421, %v858
        %v1423 = vpop.permute.xlu0 %1422
        %1426 = vset.pattern.permute.xlu0 0
        %1427 = vperm.xlu0 %1426, %v859
        %v1428 = vpop.permute.xlu0 %1427
        %1431 = vset.pattern.permute.xlu0 0
        %1432 = vperm.xlu0 %1431, %v860
        %v1433 = vpop.permute.xlu0 %1432
        %1436 = vset.pattern.permute.xlu0 0
        %1437 = vperm.xlu0 %1436, %v861
        %v1438 = vpop.permute.xlu0 %1437
        %v1440 = vsel %vm1359, %v1363, 0.0
        %v1441 = vsel %vm1359, %v1368, 0.0
        %v1442 = vsel %vm1359, %v1373, 0.0
        %v1443 = vsel %vm1359, %v1378, 0.0
        %v1444 = vsel %vm1359, %v1383, 0.0
        %v1445 = vsel %vm1359, %v1388, 0.0
        %v1446 = vsel %vm1359, %v1393, 0.0
        %v1447 = vsel %vm1359, %v1398, 0.0
        %v1448 = vsel %vm1359, %v1403, 0.0
        %v1449 = vsel %vm1359, %v1408, 0.0
        %v1450 = vsel %vm1359, %v1413, 0.0
        %v1451 = vsel %vm1359, %v1418, 0.0
        %v1452 = vsel %vm1359, %v1423, 0.0
        %v1453 = vsel %vm1359, %v1428, 0.0
        %v1454 = vsel %vm1359, %v1433, 0.0
        %v1455 = vsel %vm1359, %v1438, 0.0
        %v1456 = vadd.f32 %v1343, %v1440
        %v1457 = vadd.f32 %v1344, %v1441
        %v1458 = vadd.f32 %v1345, %v1442
        %v1459 = vadd.f32 %v1346, %v1443
        %v1460 = vadd.f32 %v1347, %v1444
        %v1461 = vadd.f32 %v1348, %v1445
        %v1462 = vadd.f32 %v1349, %v1446
        %v1463 = vadd.f32 %v1350, %v1447
        %v1464 = vadd.f32 %v1351, %v1448
        %v1465 = vadd.f32 %v1352, %v1449
        %v1466 = vadd.f32 %v1353, %v1450
        %v1467 = vadd.f32 %v1354, %v1451
        %v1468 = vadd.f32 %v1355, %v1452
        %v1469 = vadd.f32 %v1356, %v1453
        %v1470 = vadd.f32 %v1357, %v1454
        %v1471 = vadd.f32 %v1358, %v1455
        %vm1472 = vcmp.eq.s32.totalorder %v749, 2
        %1474 = vset.pattern.permute.xlu0 0
        %1475 = vperm.xlu0 %1474, %v1214
        %v1476 = vpop.permute.xlu0 %1475
        %1479 = vset.pattern.permute.xlu0 0
        %1480 = vperm.xlu0 %1479, %v1215
        %v1481 = vpop.permute.xlu0 %1480
        %1484 = vset.pattern.permute.xlu0 0
        %1485 = vperm.xlu0 %1484, %v1216
        %v1486 = vpop.permute.xlu0 %1485
        %1489 = vset.pattern.permute.xlu0 0
        %1490 = vperm.xlu0 %1489, %v1217
        %v1491 = vpop.permute.xlu0 %1490
        %1494 = vset.pattern.permute.xlu0 0
        %1495 = vperm.xlu0 %1494, %v1218
        %v1496 = vpop.permute.xlu0 %1495
        %1499 = vset.pattern.permute.xlu0 0
        %1500 = vperm.xlu0 %1499, %v1219
        %v1501 = vpop.permute.xlu0 %1500
        %1504 = vset.pattern.permute.xlu0 0
        %1505 = vperm.xlu0 %1504, %v1220
        %v1506 = vpop.permute.xlu0 %1505
        %1509 = vset.pattern.permute.xlu0 0
        %1510 = vperm.xlu0 %1509, %v1221
        %v1511 = vpop.permute.xlu0 %1510
        %1514 = vset.pattern.permute.xlu0 0
        %1515 = vperm.xlu0 %1514, %v1222
        %v1516 = vpop.permute.xlu0 %1515
        %1519 = vset.pattern.permute.xlu0 0
        %1520 = vperm.xlu0 %1519, %v1223
        %v1521 = vpop.permute.xlu0 %1520
        %1524 = vset.pattern.permute.xlu0 0
        %1525 = vperm.xlu0 %1524, %v1224
        %v1526 = vpop.permute.xlu0 %1525
        %1529 = vset.pattern.permute.xlu0 0
        %1530 = vperm.xlu0 %1529, %v1225
        %v1531 = vpop.permute.xlu0 %1530
        %1534 = vset.pattern.permute.xlu0 0
        %1535 = vperm.xlu0 %1534, %v1226
        %v1536 = vpop.permute.xlu0 %1535
        %1539 = vset.pattern.permute.xlu0 0
        %1540 = vperm.xlu0 %1539, %v1227
        %v1541 = vpop.permute.xlu0 %1540
        %1544 = vset.pattern.permute.xlu0 0
        %1545 = vperm.xlu0 %1544, %v1228
        %v1546 = vpop.permute.xlu0 %1545
        %1549 = vset.pattern.permute.xlu0 0
        %1550 = vperm.xlu0 %1549, %v1229
        %v1551 = vpop.permute.xlu0 %1550
        %v1553 = vsel %vm1472, %v1476, 0.0
        %v1554 = vsel %vm1472, %v1481, 0.0
        %v1555 = vsel %vm1472, %v1486, 0.0
        %v1556 = vsel %vm1472, %v1491, 0.0
        %v1557 = vsel %vm1472, %v1496, 0.0
        %v1558 = vsel %vm1472, %v1501, 0.0
        %v1559 = vsel %vm1472, %v1506, 0.0
        %v1560 = vsel %vm1472, %v1511, 0.0
        %v1561 = vsel %vm1472, %v1516, 0.0
        %v1562 = vsel %vm1472, %v1521, 0.0
        %v1563 = vsel %vm1472, %v1526, 0.0
        %v1564 = vsel %vm1472, %v1531, 0.0
        %v1565 = vsel %vm1472, %v1536, 0.0
        %v1566 = vsel %vm1472, %v1541, 0.0
        %v1567 = vsel %vm1472, %v1546, 0.0
        %v1568 = vsel %vm1472, %v1551, 0.0
        %v1569 = vadd.f32 %v1456, %v1553
        %v1570 = vadd.f32 %v1457, %v1554
        %v1571 = vadd.f32 %v1458, %v1555
        %v1572 = vadd.f32 %v1459, %v1556
        %v1573 = vadd.f32 %v1460, %v1557
        %v1574 = vadd.f32 %v1461, %v1558
        %v1575 = vadd.f32 %v1462, %v1559
        %v1576 = vadd.f32 %v1463, %v1560
        %v1577 = vadd.f32 %v1464, %v1561
        %v1578 = vadd.f32 %v1465, %v1562
        %v1579 = vadd.f32 %v1466, %v1563
        %v1580 = vadd.f32 %v1467, %v1564
        %v1581 = vadd.f32 %v1468, %v1565
        %v1582 = vadd.f32 %v1469, %v1566
        %v1583 = vadd.f32 %v1470, %v1567
        %v1584 = vadd.f32 %v1471, %v1568
        %v1585 = vadd.f32 %v1569, %v1570
        %v1586 = vadd.f32 %v1585, %v1571
        %v1587 = vadd.f32 %v1586, %v1572
        %v1588 = vadd.f32 %v1587, %v1573
        %v1589 = vadd.f32 %v1588, %v1574
        %v1590 = vadd.f32 %v1589, %v1575
        %v1591 = vadd.f32 %v1590, %v1576
        %v1592 = vadd.f32 %v1591, %v1577
        %v1593 = vadd.f32 %v1592, %v1578
        %v1594 = vadd.f32 %v1593, %v1579
        %v1595 = vadd.f32 %v1594, %v1580
        %v1596 = vadd.f32 %v1595, %v1581
        %v1597 = vadd.f32 %v1596, %v1582
        %v1598 = vadd.f32 %v1597, %v1583
        %v1599 = vadd.f32 %v1598, %v1584
        %v1600 = vrot.slane %v1599, 4
        %v1601 = vadd.f32 %v1599, %v1600
        %v1602 = vrot.slane %v1601, 2
        %v1603 = vadd.f32 %v1601, %v1602
        %v1604 = vrot.slane %v1603, 1
        %v1605 = vadd.f32 %v1603, %v1604
        %v1606 = vlaneseq
        %v1607 = vshrl.u32 %v1606, 7
        %vm1608 = vcmp.eq.s32.totalorder %v1607, 0
        %v1609 = vsel %vm1608, %v1605, 0.0
        %1610 = vst [vmem:[%s261] sm:$0xff] %v1609
        %s1611 = sand.u32 %s164, 1
        %s1612 = scalar_lea.sflag [#allocation3], %s1611
        %s1613 = sand.u32 %s164, 1
        %s1614 = smul.addr %s1613, 8
        %s1615 = scalar_lea.vmem [#allocation2], %s1614
        // Predicated region
        $region45: #{tpu_custom_call.1} parent=43 // pred_check
          %p1616 = pneg %p174
        $region46: #{tpu_custom_call.1} parent=43 // pred_check_branch
          %1618 = sbr.rel (%p1616) target = $region48
        $region47: #{tpu_custom_call.1} parent=43 // pred_region
          %1620 = vsyncadd %s1612, 0
          %s1621 = smul.addr %s20, 8
          %s1622 = scalar_lea.hbm %s6, %s1621
          %s1624 = sshll.u32 %s1615, 4
          %s1625 = int_to_ptr.vmem [resolvable:$true] %s1624
          %s1626 = sshll.u32 %s1622, 4
          %s1627 = int_to_ptr.hbm [resolvable:$true] %s1626
          %1629 = dma.vmem_to_hbm [thread:$0]  %s1625, 128, %s1627, %s1612
        $region48: #{tpu_custom_call.1} parent=43 // pred_fallthru
          _
      $region44: #{tpu_custom_call.1} parent=5 // pred_fallthru
        _
      %p1630 = scmp.le.s32.totalorder 2, %s15
      // Predicated region
      $region49: #{tpu_custom_call.1} parent=5 // pred_check
        %p1631 = pneg %p1630
      $region50: #{tpu_custom_call.1} parent=5 // pred_check_branch
        %1633 = sbr.rel (%p1631) target = $region52
      $region51: #{tpu_custom_call.1} parent=5 // pred_region
        %s1634 = ssub.s32 %s15, 2
        // Predicated region
        $region53: #{tpu_custom_call.1} parent=51 // pred_check
          %p1635 = pneg %p180
        $region54: #{tpu_custom_call.1} parent=51 // pred_check_branch
          %1637 = sbr.rel (%p1635) target = $region56
        $region55: #{tpu_custom_call.1} parent=51 // pred_region
          %s1638 = sand.u32 %s165, 1
          %s1639 = scalar_lea.sflag [#allocation3], %s1638
          %s1640 = sand.u32 %s165, 1
          %s1641 = smul.addr %s1640, 8
          %s1642 = scalar_lea.vmem [#allocation2], %s1641
          %1644 = dma.done %s1639, 128
        $region56: #{tpu_custom_call.1} parent=51 // pred_fallthru
          _
      $region52: #{tpu_custom_call.1} parent=5 // pred_fallthru
        _
    $region6: #{tpu_custom_call.1} parent=1 // loop_footer
      %s19 = sadd.s32 1, %s15
    $region7: #{tpu_custom_call.1} parent=1 // loop_footer_branch
      %14 = sbr.rel target = $region3
    $region8: #{tpu_custom_call.1} parent=1 // loop_exit
      _
    %1645 = vsyncpa [#allocation3], 1
    %s1646 = scalar_lea.sflag [#allocation3], 1
    %1647 = vsyncpa %s1646, 1

</llo_original>
